<compile_context>
chip_gen: v5e
topology: v5e:2x2
jax: 0.10.0
libtpu: 0.0.40
codegen_flags: <defaults>
</compile_context>

<pallas_src>
import jax
import jax.numpy as jnp
from jax.experimental import pallas as pl
from jax.experimental.pallas import tpu as pltpu

_LANE = 128
_ROW_TILE = 128                      # node-row tile (>=2 tiles at demo size)
_K_TILE_CANDIDATES = (2048, 1024, 512, 256, 128)


# --------------------------------------------------------------------------- #
# helpers
# --------------------------------------------------------------------------- #
def _round_up(x, m):
    return -(-x // m) * m


def _pick_k_tile(n_pad):
    for tk in _K_TILE_CANDIDATES:
        if n_pad % tk == 0:
            return tk
    return n_pad


def _spec(block_shape, index_map, buffers=None):
    """BlockSpec with optional pipeline depth; falls back if unsupported."""
    if buffers is None:
        return pl.BlockSpec(block_shape, index_map)
    try:
        return pl.BlockSpec(block_shape, index_map,
                            pipeline_mode=pl.Buffered(buffers))
    except (TypeError, AttributeError):
        return pl.BlockSpec(block_shape, index_map)


def _vmem_limit_bytes():
    """~85% of physical VMEM (v5e/v6e ~108 MiB, v7x ~54 MiB); 48 MiB fallback."""
    try:
        cap = pltpu.get_tpu_info().vmem_capacity_bytes
        return int(max(32 << 20, min(cap - (8 << 20), int(cap * 0.85))))
    except Exception:
        return 48 << 20


def _pad2(arr, rows, cols):
    pr, pc = rows - arr.shape[0], cols - arr.shape[1]
    if pr == 0 and pc == 0:
        return arr
    return jnp.pad(arr, ((0, pr), (0, pc)))


# --------------------------------------------------------------------------- #
# kernels
# --------------------------------------------------------------------------- #
def _layer1_kernel(a_ref, xw1_ref, b1_ref, w2_ref, mask_ref, hw2_ref, acc_ref):
    """hw2_tile = dropout(relu(A_tile @ XW1 + b1)) @ W2_pad   (K-tiled over A cols)."""
    k = pl.program_id(1)

    @pl.when(k == 0)
    def _():
        acc_ref[...] = jnp.zeros_like(acc_ref)

    acc_ref[...] += jnp.dot(a_ref[...], xw1_ref[...],
                            preferred_element_type=jnp.float32)

    @pl.when(k == pl.num_programs(1) - 1)
    def _():
        h = jnp.maximum(acc_ref[...] + b1_ref[...], 0.0) * mask_ref[...]
        hw2_ref[...] = jnp.dot(h.astype(jnp.bfloat16), w2_ref[...],
                               preferred_element_type=jnp.float32
                               ).astype(hw2_ref.dtype)


def _layer2_kernel(a_ref, hw2_ref, b2_ref, o_ref, acc_ref):
    """out_tile = sigmoid(A_tile @ HW2 + b2_pad)   (K-tiled over A cols)."""
    k = pl.program_id(1)

    @pl.when(k == 0)
    def _():
        acc_ref[...] = jnp.zeros_like(acc_ref)

    acc_ref[...] += jnp.dot(a_ref[...], hw2_ref[...],
                            preferred_element_type=jnp.float32)

    @pl.when(k == pl.num_programs(1) - 1)
    def _():
        o_ref[...] = jax.nn.sigmoid(acc_ref[...] + b2_ref[...]).astype(o_ref.dtype)


def _fused_kernel(a_ref, xw1_ref, b1_ref, w2_ref, mask_ref, b2_ref,
                  o_ref, hw2_ref):
    """Both layers in one call; A is VMEM-resident so it is read from HBM once.

    Grid = (phase, row_tile); phase 0 fills the HW2 VMEM scratch for every row
    tile, phase 1 computes sigmoid(A_rows @ HW2 + b2).  Both grid axes are
    'arbitrary' (sequential) because phase 1 depends on all phase-0 tiles.
    """
    phase = pl.program_id(0)
    i = pl.program_id(1)
    tm = o_ref.shape[0]
    r0 = pl.multiple_of(i * tm, tm)
    a_rows = a_ref[pl.ds(r0, tm), :]

    @pl.when(phase == 0)
    def _():
        acc = jnp.dot(a_rows, xw1_ref[...], preferred_element_type=jnp.float32)
        h = jnp.maximum(acc + b1_ref[...], 0.0) * mask_ref[pl.ds(r0, tm), :]
        hw2_ref[pl.ds(r0, tm), :] = jnp.dot(
            h.astype(jnp.bfloat16), w2_ref[...],
            preferred_element_type=jnp.float32).astype(hw2_ref.dtype)

    @pl.when(phase == 1)
    def _():
        z = jnp.dot(a_rows, hw2_ref[...], preferred_element_type=jnp.float32)
        o_ref[...] = jax.nn.sigmoid(z + b2_ref[...]).astype(o_ref.dtype)


# --------------------------------------------------------------------------- #
# wrapper
# --------------------------------------------------------------------------- #
def gcn_dev_forward(a_hat, x, w1, b1, w2, b2, dropout_mask, *, prefer_fused=True):
    n, _ = x.shape
    hid = w1.shape[1]
    c = w2.shape[1]
    c_pad = _round_up(max(c, _LANE), _LANE)

    tm = _ROW_TILE
    n_pad = _round_up(n, tm)
    tk = _pick_k_tile(n_pad)
    n_row_tiles = n_pad // tm

    # Loop-invariant operands prepared (and pre-cast to bf16) once on the host
    # side of the pallas_calls.  Folding X @ W1 here means every in-kernel
    # matmul is full-width on the MXU (K = N, 128-lane outputs).
    xw1 = _pad2(x.astype(jnp.float32) @ w1.astype(jnp.float32),
                n_pad, hid).astype(jnp.bfloat16)
    a_bf = _pad2(a_hat, n_pad, n_pad).astype(jnp.bfloat16)
    mask_bf = _pad2(dropout_mask, n_pad, hid).astype(jnp.bfloat16)
    w2_bf = _pad2(w2, hid, c_pad).astype(jnp.bfloat16)
    b1_f = b1.reshape(1, hid).astype(jnp.float32)
    b2_f = _pad2(b2.reshape(1, c), 1, c_pad).astype(jnp.float32)

    vmem_limit = _vmem_limit_bytes()

    # ---------------- fused small-graph path (A read from HBM once) ----------
    fused_resident = (n_pad * n_pad * 2                       # A (bf16)
                      + n_pad * (2 * hid + c_pad) * 2         # XW1 + mask + HW2
                      + hid * c_pad * 2 + 2 * (hid + c_pad) * 4)
    if prefer_fused and fused_resident <= min(vmem_limit // 2, 20 << 20):
        out_pad = pl.pallas_call(
            _fused_kernel,
            out_shape=jax.ShapeDtypeStruct((n_pad, c_pad), jnp.float32),
            grid=(2, n_row_tiles),
            in_specs=[
                _spec((n_pad, n_pad), lambda p, i: (0, 0), buffers=1),  # A (resident)
                _spec((n_pad, hid),   lambda p, i: (0, 0), buffers=1),  # XW1
                _spec((1, hid),       lambda p, i: (0, 0), buffers=1),  # b1
                _spec((hid, c_pad),   lambda p, i: (0, 0), buffers=1),  # W2 pad
                _spec((n_pad, hid),   lambda p, i: (0, 0), buffers=1),  # dropout mask
                _spec((1, c_pad),     lambda p, i: (0, 0), buffers=1),  # b2 pad
            ],
            out_specs=pl.BlockSpec((tm, c_pad), lambda p, i: (i, 0)),
            scratch_shapes=[pltpu.VMEM((n_pad, c_pad), jnp.bfloat16)],   # HW2
            compiler_params=pltpu.CompilerParams(
                dimension_semantics=("arbitrary", "arbitrary"),
                vmem_limit_bytes=vmem_limit,
            ),
        )(a_bf, xw1, b1_f, w2_bf, mask_bf, b2_f)
        return out_pad[:n, :c]

    # ---------------- general path: two row-tiled + K-tiled passes -----------
    grid = (n_row_tiles, n_pad // tk)
    cparams = pltpu.CompilerParams(
        dimension_semantics=("parallel", "arbitrary"),   # megacore-shard rows
        vmem_limit_bytes=vmem_limit,
    )

    # pass 1: HW2 = dropout(relu(A @ XW1 + b1)) @ W2_pad
    hw2 = pl.pallas_call(
        _layer1_kernel,
        out_shape=jax.ShapeDtypeStruct((n_pad, c_pad), jnp.bfloat16),
        grid=grid,
        in_specs=[
            _spec((tm, tk),     lambda i, k: (i, k)),               # A tile
            _spec((tk, hid),    lambda i, k: (k, 0)),               # XW1 K-tile
            _spec((1, hid),     lambda i, k: (0, 0), buffers=1),    # b1 (invariant)
            _spec((hid, c_pad), lambda i, k: (0, 0), buffers=1),    # W2 (invariant)
            _spec((tm, hid),    lambda i, k: (i, 0)),               # mask row tile
        ],
        out_specs=pl.BlockSpec((tm, c_pad), lambda i, k: (i, 0)),
        scratch_shapes=[pltpu.VMEM((tm, hid), jnp.float32)],
        compiler_params=cparams,
    )(a_bf, xw1, b1_f, w2_bf, mask_bf)

    # pass 2: out = sigmoid(A @ HW2 + b2_pad)
    out_pad = pl.pallas_call(
        _layer2_kernel,
        out_shape=jax.ShapeDtypeStruct((n_pad, c_pad), jnp.float32),
        grid=grid,
        in_specs=[
            _spec((tm, tk),    lambda i, k: (i, k), buffers=3),     # A stream (deep)
            _spec((tk, c_pad), lambda i, k: (k, 0)),                # HW2 K-tile
            _spec((1, c_pad),  lambda i, k: (0, 0), buffers=1),     # b2 (invariant)
        ],
        out_specs=pl.BlockSpec((tm, c_pad), lambda i, k: (i, 0)),
        scratch_shapes=[pltpu.VMEM((tm, c_pad), jnp.float32)],
        compiler_params=cparams,
    )(a_bf, hw2, b2_f)

    return out_pad[:n, :c]


# --------------------------------------------------------------------------- #
# reference + demo
# --------------------------------------------------------------------------- #
def gcn_dev_reference(a_hat, x, w1, b1, w2, b2, dropout_mask):
    h = jnp.maximum(a_hat @ (x @ w1) + b1, 0.0) * dropout_mask
    return jax.nn.sigmoid(a_hat @ (h @ w2) + b2)


def build_normalized_adjacency(key, n, edge_prob=0.05):
    # random undirected graph + self loops, then D^-1/2 (A+I) D^-1/2
    # (DGL GraphConv norm='both'; self loops keep degrees nonzero)
    upper = (jax.random.uniform(key, (n, n)) < edge_prob).astype(jnp.float32)
    upper = jnp.triu(upper, k=1)
    a = upper + upper.T + jnp.eye(n, dtype=jnp.float32)
    deg = jnp.sum(a, axis=1)
    d_inv_sqrt = 1.0 / jnp.sqrt(deg)
    return a * d_inv_sqrt[:, None] * d_inv_sqrt[None, :]


if __name__ == "__main__":
    # shapes consistent with GCN_dev(in_feats, hidden_size, number_classes, ...)
    N = 256
    IN_FEATS = 16
    HIDDEN = 128
    CLASSES = 4
    DROPOUT = 0.5

    root = jax.random.PRNGKey(0)
    k_adj, k_x, k_w1, k_w2, k_drop = jax.random.split(root, 5)

    a_hat = build_normalized_adjacency(k_adj, N)
    x = jax.random.normal(k_x, (N, IN_FEATS), dtype=jnp.float32)

    w1 = jax.random.normal(k_w1, (IN_FEATS, HIDDEN), jnp.float32) * (
        (2.0 / (IN_FEATS + HIDDEN)) ** 0.5)
    b1 = jnp.zeros((1, HIDDEN), jnp.float32)
    w2 = jax.random.normal(k_w2, (HIDDEN, CLASSES), jnp.float32) * (
        (2.0 / (HIDDEN + CLASSES)) ** 0.5)
    b2 = jnp.zeros((1, CLASSES), jnp.float32)

    # F.dropout (training mode): keep mask pre-scaled by 1/(1-p), built on host.
    if DROPOUT > 0.0:
        keep = jax.random.uniform(k_drop, (N, HIDDEN)) >= DROPOUT
        dropout_mask = keep.astype(jnp.float32) * (1.0 / (1.0 - DROPOUT))
    else:
        dropout_mask = jnp.ones((N, HIDDEN), jnp.float32)

    out_fused = jax.block_until_ready(
        gcn_dev_forward(a_hat, x, w1, b1, w2, b2, dropout_mask, prefer_fused=True))
    out_tiled = jax.block_until_ready(
        gcn_dev_forward(a_hat, x, w1, b1, w2, b2, dropout_mask, prefer_fused=False))
    ref = jax.block_until_ready(
        gcn_dev_reference(a_hat, x, w1, b1, w2, b2, dropout_mask))

    for out in (out_fused, out_tiled):
        assert out.shape == (N, CLASSES)
        assert bool(jnp.all(jnp.isfinite(out)))
        assert bool(jnp.all((out >= 0.0) & (out <= 1.0)))       # sigmoid range
        assert float(jnp.max(jnp.abs(out - ref))) < 3e-2        # bf16-A tolerance
    print("KERNEL_OK")
</pallas_src>

<mosaic_0001>
module attributes {stable_mosaic.version = 11 : i64} {
  func.func @_fused_kernel(%arg0: i32, %arg1: i32, %arg2: memref<256x256xbf16, #tpu.memory_space<vmem>>, %arg3: memref<256x128xbf16, #tpu.memory_space<vmem>>, %arg4: memref<1x128xf32, #tpu.memory_space<vmem>>, %arg5: memref<128x128xbf16, #tpu.memory_space<vmem>>, %arg6: memref<256x128xbf16, #tpu.memory_space<vmem>>, %arg7: memref<1x128xf32, #tpu.memory_space<vmem>>, %arg8: memref<128x128xf32, #tpu.memory_space<vmem>>, %arg9: memref<256x128xbf16, #tpu.memory_space<vmem>>) attributes {dimension_semantics = [#tpu.dimension_semantics<arbitrary>, #tpu.dimension_semantics<arbitrary>], iteration_bounds = array<i64: 2, 2>, scalar_prefetch = 0 : i64, scratch_operands = 1 : i64, tpu.core_type = #tpu.core_type<tc>, window_params = [{pipeline_mode = #tpu.pipeline_mode<synchronous>, transform_indices = @transform_0, window_bounds = array<i64: 256, 256>}, {pipeline_mode = #tpu.pipeline_mode<synchronous>, transform_indices = @transform_1, window_bounds = array<i64: 256, 128>}, {pipeline_mode = #tpu.pipeline_mode<synchronous>, transform_indices = @transform_2, window_bounds = array<i64: 1, 128>}, {pipeline_mode = #tpu.pipeline_mode<synchronous>, transform_indices = @transform_3, window_bounds = array<i64: 128, 128>}, {pipeline_mode = #tpu.pipeline_mode<synchronous>, transform_indices = @transform_4, window_bounds = array<i64: 256, 128>}, {pipeline_mode = #tpu.pipeline_mode<synchronous>, transform_indices = @transform_5, window_bounds = array<i64: 1, 128>}, {transform_indices = @transform_6, window_bounds = array<i64: 128, 128>}]} {
    %c128_i32 = arith.constant 128 : i32
    %0 = arith.muli %arg1, %c128_i32 : i32
    %1 = tpu.assume_multiple %0, 128 : i32
    %2 = arith.index_cast %1 : i32 to index
    %c0 = arith.constant 0 : index
    %3 = vector.load %arg2[%2, %c0] : memref<256x256xbf16, #tpu.memory_space<vmem>>, vector<128x256xbf16>
    %c0_i32 = arith.constant 0 : i32
    %4 = arith.cmpi eq, %arg0, %c0_i32 : i32
    %5 = arith.extui %4 : i1 to i32
    %c0_i32_0 = arith.constant 0 : i32
    %6 = arith.cmpi ne, %5, %c0_i32_0 : i32
    scf.if %6 {
      %c0_2 = arith.constant 0 : index
      %c0_3 = arith.constant 0 : index
      %10 = vector.load %arg3[%c0_2, %c0_3] : memref<256x128xbf16, #tpu.memory_space<vmem>>, vector<256x128xbf16>
      %cst = arith.constant dense<0.000000e+00> : vector<128x128xf32>
      %11 = tpu.matmul %3, %10, %cst {dimension_numbers = #tpu.dot_dimension_numbers<[1], [0], [0], [1], [0, 0, 1, 1], [], []>} : vector<128x256xbf16>, vector<256x128xbf16>, vector<128x128xf32> -> vector<128x128xf32>
      %c0_4 = arith.constant 0 : index
      %c0_5 = arith.constant 0 : index
      %12 = vector.load %arg4[%c0_4, %c0_5] : memref<1x128xf32, #tpu.memory_space<vmem>>, vector<1x128xf32>
      %13 = vector.broadcast %12 : vector<1x128xf32> to vector<128x128xf32>
      %14 = arith.addf %11, %13 : vector<128x128xf32>
      %cst_6 = arith.constant 0.000000e+00 : f32
      %15 = vector.broadcast %cst_6 : f32 to vector<128x128xf32>
      %16 = arith.maximumf %14, %15 : vector<128x128xf32>
      %17 = arith.index_cast %1 : i32 to index
      %c0_7 = arith.constant 0 : index
      %18 = vector.load %arg6[%17, %c0_7] : memref<256x128xbf16, #tpu.memory_space<vmem>>, vector<128x128xbf16>
      %19 = arith.extf %18 : vector<128x128xbf16> to vector<128x128xf32>
      %20 = arith.mulf %16, %19 : vector<128x128xf32>
      %21 = arith.truncf %20 : vector<128x128xf32> to vector<128x128xbf16>
      %c0_8 = arith.constant 0 : index
      %c0_9 = arith.constant 0 : index
      %22 = vector.load %arg5[%c0_8, %c0_9] : memref<128x128xbf16, #tpu.memory_space<vmem>>, vector<128x128xbf16>
      %cst_10 = arith.constant dense<0.000000e+00> : vector<128x128xf32>
      %23 = tpu.matmul %21, %22, %cst_10 {dimension_numbers = #tpu.dot_dimension_numbers<[1], [0], [0], [1], [0, 0, 1, 1], [], []>} : vector<128x128xbf16>, vector<128x128xbf16>, vector<128x128xf32> -> vector<128x128xf32>
      %24 = arith.truncf %23 : vector<128x128xf32> to vector<128x128xbf16>
      %25 = arith.index_cast %1 : i32 to index
      %c0_11 = arith.constant 0 : index
      %26 = vector.load %arg9[%25, %c0_11] : memref<256x128xbf16, #tpu.memory_space<vmem>>, vector<128x128xbf16>
      tpu.vector_store %arg9[%25, %c0_11], %24 {strides = array<i32>} : memref<256x128xbf16, #tpu.memory_space<vmem>>, vector<128x128xbf16>,
    } else {
    }
    %c1_i32 = arith.constant 1 : i32
    %7 = arith.cmpi eq, %arg0, %c1_i32 : i32
    %8 = arith.extui %7 : i1 to i32
    %c0_i32_1 = arith.constant 0 : i32
    %9 = arith.cmpi ne, %8, %c0_i32_1 : i32
    scf.if %9 {
      %c0_2 = arith.constant 0 : index
      %c0_3 = arith.constant 0 : index
      %10 = vector.load %arg9[%c0_2, %c0_3] : memref<256x128xbf16, #tpu.memory_space<vmem>>, vector<256x128xbf16>
      %cst = arith.constant dense<0.000000e+00> : vector<128x128xf32>
      %11 = tpu.matmul %3, %10, %cst {dimension_numbers = #tpu.dot_dimension_numbers<[1], [0], [0], [1], [0, 0, 1, 1], [], []>} : vector<128x256xbf16>, vector<256x128xbf16>, vector<128x128xf32> -> vector<128x128xf32>
      %c0_4 = arith.constant 0 : index
      %c0_5 = arith.constant 0 : index
      %12 = vector.load %arg7[%c0_4, %c0_5] : memref<1x128xf32, #tpu.memory_space<vmem>>, vector<1x128xf32>
      %13 = vector.broadcast %12 : vector<1x128xf32> to vector<128x128xf32>
      %14 = arith.addf %11, %13 : vector<128x128xf32>
      %15 = arith.negf %14 : vector<128x128xf32>
      %16 = math.exp %15 : vector<128x128xf32>
      %cst_6 = arith.constant 1.000000e+00 : f32
      %17 = vector.broadcast %cst_6 : f32 to vector<128x128xf32>
      %18 = arith.addf %17, %16 : vector<128x128xf32>
      %19 = arith.divf %17, %18 : vector<128x128xf32>
      %c0_7 = arith.constant 0 : index
      %c0_8 = arith.constant 0 : index
      %20 = vector.load %arg8[%c0_7, %c0_8] : memref<128x128xf32, #tpu.memory_space<vmem>>, vector<128x128xf32>
      tpu.vector_store %arg8[%c0_7, %c0_8], %19 {strides = array<i32>} : memref<128x128xf32, #tpu.memory_space<vmem>>, vector<128x128xf32>,
    } else {
    }
    return
  }
  func.func @transform_0(%arg0: i32, %arg1: i32) -> (i32, i32) {
    %c0_i32 = arith.constant 0 : i32
    %c0_i32_0 = arith.constant 0 : i32
    %c0_i32_1 = arith.constant 0 : i32
    return %c0_i32, %c0_i32_0 : i32, i32
  }
  func.func @transform_1(%arg0: i32, %arg1: i32) -> (i32, i32) {
    %c0_i32 = arith.constant 0 : i32
    %c0_i32_0 = arith.constant 0 : i32
    %c0_i32_1 = arith.constant 0 : i32
    return %c0_i32, %c0_i32_0 : i32, i32
  }
  func.func @transform_2(%arg0: i32, %arg1: i32) -> (i32, i32) {
    %c0_i32 = arith.constant 0 : i32
    %c0_i32_0 = arith.constant 0 : i32
    %c0_i32_1 = arith.constant 0 : i32
    return %c0_i32, %c0_i32_0 : i32, i32
  }
  func.func @transform_3(%arg0: i32, %arg1: i32) -> (i32, i32) {
    %c0_i32 = arith.constant 0 : i32
    %c0_i32_0 = arith.constant 0 : i32
    %c0_i32_1 = arith.constant 0 : i32
    return %c0_i32, %c0_i32_0 : i32, i32
  }
  func.func @transform_4(%arg0: i32, %arg1: i32) -> (i32, i32) {
    %c0_i32 = arith.constant 0 : i32
    %c0_i32_0 = arith.constant 0 : i32
    %c0_i32_1 = arith.constant 0 : i32
    return %c0_i32, %c0_i32_0 : i32, i32
  }
  func.func @transform_5(%arg0: i32, %arg1: i32) -> (i32, i32) {
    %c0_i32 = arith.constant 0 : i32
    %c0_i32_0 = arith.constant 0 : i32
    %c0_i32_1 = arith.constant 0 : i32
    return %c0_i32, %c0_i32_0 : i32, i32
  }
  func.func @transform_6(%arg0: i32, %arg1: i32) -> (i32, i32) {
    %c0_i32 = arith.constant 0 : i32
    %c0_i32_0 = arith.constant 0 : i32
    return %arg1, %c0_i32 : i32, i32
  }
}

</mosaic_0001>

<llo_original>
// kernel: tpu_custom_call.1
$region0: #{tpu_custom_call.1}
  #allocation0 [shape = 'u32[]', space=smem, size = 0x4, offset = 0x4, fixed_abs, tag = 'smem constant byte address 0x4 - core index']
  #allocation1 [shape = 'u32[72,128]{1,0:T(1,128)}', space=vmem, size = 0x9000, scoped, tag = 'internal scratch']
  #allocation2 [shape = 'bf16[256,128]{1,0:T(8,128)(2,1)}', space=vmem, size = 0x10000, scoped, tag = 'scratch operand']
  %s0 = inlined_call_operand.hbm [shape: bf16[256,256], index: 0, kind: input, shape index: {}]
  %s1 = inlined_call_operand.hbm [shape: bf16[256,128], index: 1, kind: input, shape index: {}]
  %s2 = inlined_call_operand.vmem [shape: f32[1,128], index: 2, kind: input, shape index: {}]
  %s3 = inlined_call_operand.hbm [shape: bf16[128,128], index: 3, kind: input, shape index: {}]
  %s4 = inlined_call_operand.hbm [shape: bf16[256,128], index: 4, kind: input, shape index: {}]
  %s5 = inlined_call_operand.vmem [shape: f32[1,128], index: 5, kind: input, shape index: {}]
  %s6 = inlined_call_operand.hbm [shape: f32[256,128], index: 6, kind: output, shape index: {}]
  %s7 = sld [smem:[#allocation0]]
  $region81: #{tpu_custom_call.1} parent=0
    _
  %s9 = ssub.s32 1, %s7
  %s10 = scalar_select 0, %s9, %s7
  $region1: #{tpu_custom_call.1} parent=0
    #allocation3 [shape = 'u8[131072]{0}', space=vmem, size = 0x20000, scoped, tag = 'input window, operand 0, single buffered']
    #allocation4 [shape = 's32[2]{0}', space=sflag, size = 0x8, scoped, tag = 'scoped memory for tpu_custom_call.1']
    #allocation5 [shape = 's32[2]{0}', space=sflag, size = 0x8, scoped, tag = 'scoped memory for tpu_custom_call.1']
    #allocation6 [shape = 'u8[65536]{0}', space=vmem, size = 0x10000, scoped, tag = 'input window, operand 1, single buffered']
    #allocation7 [shape = 's32[1]{0}', space=sflag, size = 0x4, scoped, tag = 'scoped memory for tpu_custom_call.1']
    #allocation8 [shape = 'u8[32768]{0}', space=vmem, size = 0x8000, scoped, tag = 'input window, operand 3, single buffered']
    #allocation9 [shape = 'u8[65536]{0}', space=vmem, size = 0x10000, scoped, tag = 'input window, operand 4, single buffered']
    #allocation10 [shape = 's32[1]{0}', space=sflag, size = 0x4, scoped, tag = 'scoped memory for tpu_custom_call.1']
    #allocation11 [shape = 'u8[131072]{0}', space=vmem, size = 0x20000, scoped, tag = 'output window, operand 0']
    %11 = vsyncpa [#allocation4], 0
    %12 = vsyncpa [#allocation7], 0
    %13 = vsyncpa [#allocation10], 0
    %14 = vsyncpa [#allocation5], 0
    %s15 = scalar_lea.sflag [#allocation5], 1
    %16 = vsyncpa %s15, 0
    loop: start=0, step=1, limit=6
    $region2: #{tpu_custom_call.1} parent=1 // loop_pre_header
      _
    $region3: #{tpu_custom_call.1} parent=1 // loop_header
      %s18 = sphi 0, %s22
      %p19 = scmp.ge.s32.totalorder %s18, 6
      %s25 = sphi 0, %s37
      %s26 = sphi 0, %s33
      %s27 = sphi 0, %s25
      %s28 = sphi 0, %s26
      %s29 = sphi 0, %s27
      %s30 = sphi 0, %s28
      %s38 = sphi 0, %s38
      %s40 = sphi 0, %s38
      %s41 = sphi 0, %s40
      %s55 = sphi 0, %s41
      %s59 = sphi 0, %s59
      %s61 = sphi 0, %s59
      %s62 = sphi 0, %s61
      %s76 = sphi 0, %s62
      %s80 = sphi 0, %s80
      %s82 = sphi 0, %s80
      %s83 = sphi 0, %s82
      %s97 = sphi 0, %s83
      %s101 = sphi 0, %s101
      %s103 = sphi 0, %s101
      %s104 = sphi 0, %s103
      %s118 = sphi 0, %s104
      %s122 = sphi 0, %s122
      %s124 = sphi 0, %s122
      %s125 = sphi 0, %s124
      %s139 = sphi 0, %s125
      %s143 = sphi 0, %s143
      %s145 = sphi 0, %s143
      %s146 = sphi 0, %s145
      %s160 = sphi 0, %s146
      %s166 = sphi 0, %s168
      %s169 = sphi 0, %s166
      %s170 = sphi 0, %s169
      %s186 = sphi 0, %s170
    $region4: #{tpu_custom_call.1} parent=1 // loop_header_branch
      %21 = sbr.rel (%p19) target = $region8
    $region5: #{tpu_custom_call.1} parent=1 // loop_body
      %s23 = ssub.s32 %s18, 1
      %s24 = ssub.s32 %s18, 2
      %s31 = sadd.s32 1, %s26
      %p32 = scmp.ge.s32.totalorder %s31, 2
      %s33 = scalar_select %p32, 0, %s31
      %s34 = sadd.s32 1, %s25
      %s35 = scalar_select %p32, %s34, %s25
      %p36 = scmp.ge.s32.totalorder %s35, 2
      %s37 = scalar_select %p36, 0, %s35
      %s39 = sadd.s32 %s38, 1
      %p42 = scmp.eq.s32.totalorder %s18, 3
      %p43 = scmp.ne.s32.totalorder %s38, %s40
      %p44 = scmp.eq.s32.totalorder %s18, 0
      %p45 = por %p43, %p44
      %p46 = scmp.ne.s32.totalorder %s38, %s40
      %p47 = scmp.eq.s32.totalorder %s23, 3
      %p48 = por %p46, %p47
      %p49 = scmp.ne.s32.totalorder %s40, %s41
      %p50 = scmp.eq.s32.totalorder %s23, 0
      %p51 = por %p49, %p50
      %p52 = scmp.ne.s32.totalorder %s40, %s41
      %p53 = scmp.eq.s32.totalorder %s24, 3
      %p54 = por %p52, %p53
      %p56 = scmp.ne.s32.totalorder %s41, %s55
      %p57 = scmp.eq.s32.totalorder %s24, 0
      %p58 = por %p56, %p57
      %s60 = sadd.s32 %s59, 1
      %p63 = scmp.eq.s32.totalorder %s18, 3
      %p64 = scmp.ne.s32.totalorder %s59, %s61
      %p65 = scmp.eq.s32.totalorder %s18, 0
      %p66 = por %p64, %p65
      %p67 = scmp.ne.s32.totalorder %s59, %s61
      %p68 = scmp.eq.s32.totalorder %s23, 3
      %p69 = por %p67, %p68
      %p70 = scmp.ne.s32.totalorder %s61, %s62
      %p71 = scmp.eq.s32.totalorder %s23, 0
      %p72 = por %p70, %p71
      %p73 = scmp.ne.s32.totalorder %s61, %s62
      %p74 = scmp.eq.s32.totalorder %s24, 3
      %p75 = por %p73, %p74
      %p77 = scmp.ne.s32.totalorder %s62, %s76
      %p78 = scmp.eq.s32.totalorder %s24, 0
      %p79 = por %p77, %p78
      %s81 = sadd.s32 %s80, 1
      %p84 = scmp.eq.s32.totalorder %s18, 3
      %p85 = scmp.ne.s32.totalorder %s80, %s82
      %p86 = scmp.eq.s32.totalorder %s18, 0
      %p87 = por %p85, %p86
      %p88 = scmp.ne.s32.totalorder %s80, %s82
      %p89 = scmp.eq.s32.totalorder %s23, 3
      %p90 = por %p88, %p89
      %p91 = scmp.ne.s32.totalorder %s82, %s83
      %p92 = scmp.eq.s32.totalorder %s23, 0
      %p93 = por %p91, %p92
      %p94 = scmp.ne.s32.totalorder %s82, %s83
      %p95 = scmp.eq.s32.totalorder %s24, 3
      %p96 = por %p94, %p95
      %p98 = scmp.ne.s32.totalorder %s83, %s97
      %p99 = scmp.eq.s32.totalorder %s24, 0
      %p100 = por %p98, %p99
      %s102 = sadd.s32 %s101, 1
      %p105 = scmp.eq.s32.totalorder %s18, 3
      %p106 = scmp.ne.s32.totalorder %s101, %s103
      %p107 = scmp.eq.s32.totalorder %s18, 0
      %p108 = por %p106, %p107
      %p109 = scmp.ne.s32.totalorder %s101, %s103
      %p110 = scmp.eq.s32.totalorder %s23, 3
      %p111 = por %p109, %p110
      %p112 = scmp.ne.s32.totalorder %s103, %s104
      %p113 = scmp.eq.s32.totalorder %s23, 0
      %p114 = por %p112, %p113
      %p115 = scmp.ne.s32.totalorder %s103, %s104
      %p116 = scmp.eq.s32.totalorder %s24, 3
      %p117 = por %p115, %p116
      %p119 = scmp.ne.s32.totalorder %s104, %s118
      %p120 = scmp.eq.s32.totalorder %s24, 0
      %p121 = por %p119, %p120
      %s123 = sadd.s32 %s122, 1
      %p126 = scmp.eq.s32.totalorder %s18, 3
      %p127 = scmp.ne.s32.totalorder %s122, %s124
      %p128 = scmp.eq.s32.totalorder %s18, 0
      %p129 = por %p127, %p128
      %p130 = scmp.ne.s32.totalorder %s122, %s124
      %p131 = scmp.eq.s32.totalorder %s23, 3
      %p132 = por %p130, %p131
      %p133 = scmp.ne.s32.totalorder %s124, %s125
      %p134 = scmp.eq.s32.totalorder %s23, 0
      %p135 = por %p133, %p134
      %p136 = scmp.ne.s32.totalorder %s124, %s125
      %p137 = scmp.eq.s32.totalorder %s24, 3
      %p138 = por %p136, %p137
      %p140 = scmp.ne.s32.totalorder %s125, %s139
      %p141 = scmp.eq.s32.totalorder %s24, 0
      %p142 = por %p140, %p141
      %s144 = sadd.s32 %s143, 1
      %p147 = scmp.eq.s32.totalorder %s18, 3
      %p148 = scmp.ne.s32.totalorder %s143, %s145
      %p149 = scmp.eq.s32.totalorder %s18, 0
      %p150 = por %p148, %p149
      %p151 = scmp.ne.s32.totalorder %s143, %s145
      %p152 = scmp.eq.s32.totalorder %s23, 3
      %p153 = por %p151, %p152
      %p154 = scmp.ne.s32.totalorder %s145, %s146
      %p155 = scmp.eq.s32.totalorder %s23, 0
      %p156 = por %p154, %p155
      %p157 = scmp.ne.s32.totalorder %s145, %s146
      %p158 = scmp.eq.s32.totalorder %s24, 3
      %p159 = por %p157, %p158
      %p161 = scmp.ne.s32.totalorder %s146, %s160
      %p162 = scmp.eq.s32.totalorder %s24, 0
      %p163 = por %p161, %p162
      %s164 = ssub.s32 %s26, %s33
      %p165 = scmp.eq.s32.totalorder %s164, 0
      %s167 = sadd.s32 %s166, 1
      %s168 = scalar_select %p165, %s166, %s167
      %p171 = pneg %p165
      %p172 = scmp.eq.s32.totalorder %s18, 3
      %p173 = por %p171, %p172
      %p174 = scmp.ne.s32.totalorder %s166, %s169
      %p175 = scmp.eq.s32.totalorder %s18, 0
      %p176 = por %p174, %p175
      %p177 = scmp.ne.s32.totalorder %s166, %s169
      %p178 = scmp.eq.s32.totalorder %s23, 3
      %p179 = por %p177, %p178
      %p180 = scmp.ne.s32.totalorder %s169, %s170
      %p181 = scmp.eq.s32.totalorder %s23, 0
      %p182 = por %p180, %p181
      %p183 = scmp.ne.s32.totalorder %s169, %s170
      %p184 = scmp.eq.s32.totalorder %s24, 3
      %p185 = por %p183, %p184
      %p187 = scmp.ne.s32.totalorder %s170, %s186
      %p188 = scmp.eq.s32.totalorder %s24, 0
      %p189 = por %p187, %p188
      %p190 = scmp.le.s32.totalorder 1, %s18
      %p191 = scmp.lt.s32.totalorder %s18, 5
      %p192 = pnand %p190, %p191
      %p193 = pneg %p192
      // Predicated region
      $region9: #{tpu_custom_call.1} parent=5 // pred_check
        _
      $region10: #{tpu_custom_call.1} parent=5 // pred_check_branch
        %195 = sbr.rel (%p192) target = $region12
      $region11: #{tpu_custom_call.1} parent=5 // pred_region
        %s196 = ssub.s32 %s18, 1
        // Predicated region
        $region13: #{tpu_custom_call.1} parent=11 // pred_check
          %p197 = pneg %p51
        $region14: #{tpu_custom_call.1} parent=11 // pred_check_branch
          %199 = sbr.rel (%p197) target = $region16
        $region15: #{tpu_custom_call.1} parent=11 // pred_region
          %201 = vsyncadd [#allocation4], 0
          %s202 = sshll.u32 %s0, 4
          %s203 = int_to_ptr.hbm [resolvable:$true] %s202
          %s204 = sshll.u32 [#allocation3], 4
          %s205 = int_to_ptr.vmem [resolvable:$true] %s204
          %210 = dma.hbm_to_vmem [thread:$0]  %s203, 4096, %s205, [#allocation4], 128, 128, 8
        $region16: #{tpu_custom_call.1} parent=11 // pred_fallthru
          _
        // Predicated region
        $region17: #{tpu_custom_call.1} parent=11 // pred_check
          %p211 = pneg %p72
        $region18: #{tpu_custom_call.1} parent=11 // pred_check_branch
          %213 = sbr.rel (%p211) target = $region20
        $region19: #{tpu_custom_call.1} parent=11 // pred_region
          %215 = vsyncadd [#allocation7], 0
          %s216 = sshll.u32 %s1, 4
          %s217 = int_to_ptr.hbm [resolvable:$true] %s216
          %s218 = sshll.u32 [#allocation6], 4
          %s219 = int_to_ptr.vmem [resolvable:$true] %s218
          %224 = dma.hbm_to_vmem [thread:$0]  %s217, 2048, %s219, [#allocation7], 64, 64, 4
        $region20: #{tpu_custom_call.1} parent=11 // pred_fallthru
          _
        // Predicated region
        $region21: #{tpu_custom_call.1} parent=11 // pred_check
          %p225 = pneg %p93
        $region22: #{tpu_custom_call.1} parent=11 // pred_check_branch
          %227 = sbr.rel (%p225) target = $region24
        $region23: #{tpu_custom_call.1} parent=11 // pred_region
          _
        $region24: #{tpu_custom_call.1} parent=11 // pred_fallthru
          _
        // Predicated region
        $region25: #{tpu_custom_call.1} parent=11 // pred_check
          %p228 = pneg %p114
        $region26: #{tpu_custom_call.1} parent=11 // pred_check_branch
          %230 = sbr.rel (%p228) target = $region28
        $region27: #{tpu_custom_call.1} parent=11 // pred_region
          %232 = vsyncadd [#allocation7], 0
          %s233 = sshll.u32 %s3, 4
          %s234 = int_to_ptr.hbm [resolvable:$true] %s233
          %s235 = sshll.u32 [#allocation8], 4
          %s236 = int_to_ptr.vmem [resolvable:$true] %s235
          %241 = dma.hbm_to_vmem [thread:$0]  %s234, 1024, %s236, [#allocation7], 64, 64, 4
        $region28: #{tpu_custom_call.1} parent=11 // pred_fallthru
          _
        // Predicated region
        $region29: #{tpu_custom_call.1} parent=11 // pred_check
          %p242 = pneg %p135
        $region30: #{tpu_custom_call.1} parent=11 // pred_check_branch
          %244 = sbr.rel (%p242) target = $region32
        $region31: #{tpu_custom_call.1} parent=11 // pred_region
          %246 = vsyncadd [#allocation10], 0
          %s247 = sshll.u32 %s4, 4
          %s248 = int_to_ptr.hbm [resolvable:$true] %s247
          %s249 = sshll.u32 [#allocation9], 4
          %s250 = int_to_ptr.vmem [resolvable:$true] %s249
          %255 = dma.hbm_to_vmem [thread:$0]  %s248, 2048, %s250, [#allocation10], 64, 64, 4
        $region32: #{tpu_custom_call.1} parent=11 // pred_fallthru
          _
        // Predicated region
        $region33: #{tpu_custom_call.1} parent=11 // pred_check
          %p256 = pneg %p156
        $region34: #{tpu_custom_call.1} parent=11 // pred_check_branch
          %258 = sbr.rel (%p256) target = $region36
        $region35: #{tpu_custom_call.1} parent=11 // pred_region
          _
        $region36: #{tpu_custom_call.1} parent=11 // pred_fallthru
          _
      $region12: #{tpu_custom_call.1} parent=5 // pred_fallthru
        _
      %p259 = scmp.lt.s32.totalorder %s18, 4
      // Predicated region
      $region37: #{tpu_custom_call.1} parent=5 // pred_check
        %p260 = pneg %p259
      $region38: #{tpu_custom_call.1} parent=5 // pred_check_branch
        %262 = sbr.rel (%p260) target = $region40
      $region39: #{tpu_custom_call.1} parent=5 // pred_region
        _
      $region40: #{tpu_custom_call.1} parent=5 // pred_fallthru
        _
      %p263 = scmp.le.s32.totalorder 1, %s18
      %p264 = scmp.lt.s32.totalorder %s18, 5
      %p265 = pnand %p263, %p264
      %p266 = pneg %p265
      // Predicated region
      $region41: #{tpu_custom_call.1} parent=5 // pred_check
        _
      $region42: #{tpu_custom_call.1} parent=5 // pred_check_branch
        %268 = sbr.rel (%p265) target = $region44
      $region43: #{tpu_custom_call.1} parent=5 // pred_region
        %s269 = ssub.s32 %s18, 1
        // Predicated region
        $region45: #{tpu_custom_call.1} parent=43 // pred_check
          %p270 = pneg %p51
        $region46: #{tpu_custom_call.1} parent=43 // pred_check_branch
          %272 = sbr.rel (%p270) target = $region48
        $region47: #{tpu_custom_call.1} parent=43 // pred_region
          %274 = dma.done [#allocation4], 4096
        $region48: #{tpu_custom_call.1} parent=43 // pred_fallthru
          _
        // Predicated region
        $region49: #{tpu_custom_call.1} parent=43 // pred_check
          %p275 = pneg %p72
        $region50: #{tpu_custom_call.1} parent=43 // pred_check_branch
          %277 = sbr.rel (%p275) target = $region52
        $region51: #{tpu_custom_call.1} parent=43 // pred_region
          %279 = dma.done [#allocation7], 2048
        $region52: #{tpu_custom_call.1} parent=43 // pred_fallthru
          _
        // Predicated region
        $region53: #{tpu_custom_call.1} parent=43 // pred_check
          %p280 = pneg %p114
        $region54: #{tpu_custom_call.1} parent=43 // pred_check_branch
          %282 = sbr.rel (%p280) target = $region56
        $region55: #{tpu_custom_call.1} parent=43 // pred_region
          %284 = dma.done [#allocation7], 1024
        $region56: #{tpu_custom_call.1} parent=43 // pred_fallthru
          _
        // Predicated region
        $region57: #{tpu_custom_call.1} parent=43 // pred_check
          %p285 = pneg %p135
        $region58: #{tpu_custom_call.1} parent=43 // pred_check_branch
          %287 = sbr.rel (%p285) target = $region60
        $region59: #{tpu_custom_call.1} parent=43 // pred_region
          %289 = dma.done [#allocation10], 2048
        $region60: #{tpu_custom_call.1} parent=43 // pred_fallthru
          _
        %p290 = pneg %p51
        %p291 = pneg %p48
        %p292 = pneg %p72
        %p293 = pneg %p69
        %p294 = pneg %p93
        %p295 = pneg %p90
        %p296 = pneg %p114
        %p297 = pneg %p111
        %p298 = pneg %p135
        %p299 = pneg %p132
        %p300 = pneg %p156
        %p301 = pneg %p153
        %p302 = pneg %p182
        %p303 = pneg %p179
        %s304 = sand.u32 %s169, 1
        %s305 = scalar_lea.sflag [#allocation5], %s304
        %s306 = sand.u32 %s169, 1
        %s307 = smul.addr %s306, 128
        %s308 = scalar_lea.vmem [#allocation11], %s307
        %s309 = smul.u32 16, %s28
        %s310 = smul.u32 %s28, 128
        %s311 = sshra.s32 %s310, 3
        %s312 = sand.u32 %s310, 7
        %s313 = smul.u32 %s311, 2
        %s314 = smul.addr %s313, 4
        %s315 = scalar_lea.vmem [#allocation3], %s314
        %v316 = vld [vmem:[%s315] sm:$0xff]
        %v317 = vld [vmem:[%s315 + $0x8] sm:$0xff]
        %v318 = vld [vmem:[%s315 + $0x10] sm:$0xff]
        %v319 = vld [vmem:[%s315 + $0x18] sm:$0xff]
        %v320 = vld [vmem:[%s315 + $0x20] sm:$0xff]
        %v321 = vld [vmem:[%s315 + $0x28] sm:$0xff]
        %v322 = vld [vmem:[%s315 + $0x30] sm:$0xff]
        %v323 = vld [vmem:[%s315 + $0x38] sm:$0xff]
        %v324 = vld [vmem:[%s315 + $0x40] sm:$0xff]
        %v325 = vld [vmem:[%s315 + $0x48] sm:$0xff]
        %v326 = vld [vmem:[%s315 + $0x50] sm:$0xff]
        %v327 = vld [vmem:[%s315 + $0x58] sm:$0xff]
        %v328 = vld [vmem:[%s315 + $0x60] sm:$0xff]
        %v329 = vld [vmem:[%s315 + $0x68] sm:$0xff]
        %v330 = vld [vmem:[%s315 + $0x70] sm:$0xff]
        %v331 = vld [vmem:[%s315 + $0x78] sm:$0xff]
        %p332 = scmp.eq.s32.totalorder %s27, 0
        // Predicated region
        $region61: #{tpu_custom_call.1} parent=43 // pred_check
          %p333 = pneg %p332
        $region62: #{tpu_custom_call.1} parent=43 // pred_check_branch
          %335 = sbr.rel (%p333) target = $region64
        $region63: #{tpu_custom_call.1} parent=43 // pred_region
          %v336 = vld [vmem:[#allocation6] sm:$0xf]
          %v337 = vld [vmem:[#allocation6 + $0x4] sm:$0xf]
          %v338 = vld [vmem:[#allocation6 + $0x8] sm:$0xf]
          %v339 = vld [vmem:[#allocation6 + $0xc] sm:$0xf]
          %v340 = vld [vmem:[#allocation6 + $0x10] sm:$0xf]
          %v341 = vld [vmem:[#allocation6 + $0x14] sm:$0xf]
          %v342 = vld [vmem:[#allocation6 + $0x18] sm:$0xf]
          %v343 = vld [vmem:[#allocation6 + $0x1c] sm:$0xf]
          %v344 = vld [vmem:[#allocation6 + $0x20] sm:$0xf]
          %v345 = vld [vmem:[#allocation6 + $0x24] sm:$0xf]
          %v346 = vld [vmem:[#allocation6 + $0x28] sm:$0xf]
          %v347 = vld [vmem:[#allocation6 + $0x2c] sm:$0xf]
          %v348 = vld [vmem:[#allocation6 + $0x30] sm:$0xf]
          %v349 = vld [vmem:[#allocation6 + $0x34] sm:$0xf]
          %v350 = vld [vmem:[#allocation6 + $0x38] sm:$0xf]
          %v351 = vld [vmem:[#allocation6 + $0x3c] sm:$0xf]
          %v352 = vld [vmem:[#allocation6 + $0x40] sm:$0xf]
          %v353 = vld [vmem:[#allocation6 + $0x44] sm:$0xf]
          %v354 = vld [vmem:[#allocation6 + $0x48] sm:$0xf]
          %v355 = vld [vmem:[#allocation6 + $0x4c] sm:$0xf]
          %v356 = vld [vmem:[#allocation6 + $0x50] sm:$0xf]
          %v357 = vld [vmem:[#allocation6 + $0x54] sm:$0xf]
          %v358 = vld [vmem:[#allocation6 + $0x58] sm:$0xf]
          %v359 = vld [vmem:[#allocation6 + $0x5c] sm:$0xf]
          %v360 = vld [vmem:[#allocation6 + $0x60] sm:$0xf]
          %v361 = vld [vmem:[#allocation6 + $0x64] sm:$0xf]
          %v362 = vld [vmem:[#allocation6 + $0x68] sm:$0xf]
          %v363 = vld [vmem:[#allocation6 + $0x6c] sm:$0xf]
          %v364 = vld [vmem:[#allocation6 + $0x70] sm:$0xf]
          %v365 = vld [vmem:[#allocation6 + $0x74] sm:$0xf]
          %v366 = vld [vmem:[#allocation6 + $0x78] sm:$0xf]
          %v367 = vld [vmem:[#allocation6 + $0x7c] sm:$0xf]
          %v368 = vld [vmem:[%s2] sm:$0x1]
          %v370 = vperm.slane %v368, 0
          %v388 = vunpack.c.l.b16 %v316
          %v389 = vunpack.c.h.b16 %v316
          %v390 = vunpack.c.l.b16 %v317
          %v391 = vunpack.c.h.b16 %v317
          %v392 = vunpack.c.l.b16 %v318
          %v393 = vunpack.c.h.b16 %v318
          %v394 = vunpack.c.l.b16 %v319
          %v395 = vunpack.c.h.b16 %v319
          %v396 = vunpack.c.l.b16 %v320
          %v397 = vunpack.c.h.b16 %v320
          %v398 = vunpack.c.l.b16 %v321
          %v399 = vunpack.c.h.b16 %v321
          %v400 = vunpack.c.l.b16 %v322
          %v401 = vunpack.c.h.b16 %v322
          %v402 = vunpack.c.l.b16 %v323
          %v403 = vunpack.c.h.b16 %v323
          %v404 = vunpack.c.l.b16 %v324
          %v405 = vunpack.c.h.b16 %v324
          %v406 = vunpack.c.l.b16 %v325
          %v407 = vunpack.c.h.b16 %v325
          %v408 = vunpack.c.l.b16 %v326
          %v409 = vunpack.c.h.b16 %v326
          %v410 = vunpack.c.l.b16 %v327
          %v411 = vunpack.c.h.b16 %v327
          %v412 = vunpack.c.l.b16 %v328
          %v413 = vunpack.c.h.b16 %v328
          %v414 = vunpack.c.l.b16 %v329
          %v415 = vunpack.c.h.b16 %v329
          %v416 = vunpack.c.l.b16 %v330
          %v417 = vunpack.c.h.b16 %v330
          %v418 = vunpack.c.l.b16 %v331
          %v419 = vunpack.c.h.b16 %v331
          %v420 = vpack.c.b16 %v390, %v388
          %v421 = vpack.c.b16 %v391, %v389
          %v422 = vpack.c.b16 %v394, %v392
          %v423 = vpack.c.b16 %v395, %v393
          %v424 = vpack.c.b16 %v398, %v396
          %v425 = vpack.c.b16 %v399, %v397
          %v426 = vpack.c.b16 %v402, %v400
          %v427 = vpack.c.b16 %v403, %v401
          %v428 = vpack.c.b16 %v406, %v404
          %v429 = vpack.c.b16 %v407, %v405
          %v430 = vpack.c.b16 %v410, %v408
          %v431 = vpack.c.b16 %v411, %v409
          %v432 = vpack.c.b16 %v414, %v412
          %v433 = vpack.c.b16 %v415, %v413
          %v434 = vpack.c.b16 %v418, %v416
          %v435 = vpack.c.b16 %v419, %v417
          %v484 = vunpack.c.l.b16 %v336
          %v485 = vunpack.c.l.b16 %v337
          %v486 = vunpack.c.l.b16 %v338
          %v487 = vunpack.c.l.b16 %v339
          %v488 = vunpack.c.l.b16 %v340
          %v489 = vunpack.c.l.b16 %v341
          %v490 = vunpack.c.l.b16 %v342
          %v491 = vunpack.c.l.b16 %v343
          %v492 = vunpack.c.l.b16 %v344
          %v493 = vunpack.c.l.b16 %v345
          %v494 = vunpack.c.l.b16 %v346
          %v495 = vunpack.c.l.b16 %v347
          %v496 = vunpack.c.l.b16 %v348
          %v497 = vunpack.c.l.b16 %v349
          %v498 = vunpack.c.l.b16 %v350
          %v499 = vunpack.c.l.b16 %v351
          %v500 = vunpack.c.l.b16 %v352
          %v501 = vunpack.c.l.b16 %v353
          %v502 = vunpack.c.l.b16 %v354
          %v503 = vunpack.c.l.b16 %v355
          %v504 = vunpack.c.l.b16 %v356
          %v505 = vunpack.c.l.b16 %v357
          %v506 = vunpack.c.l.b16 %v358
          %v507 = vunpack.c.l.b16 %v359
          %v508 = vunpack.c.l.b16 %v360
          %v509 = vunpack.c.l.b16 %v361
          %v510 = vunpack.c.l.b16 %v362
          %v511 = vunpack.c.l.b16 %v363
          %v512 = vunpack.c.l.b16 %v364
          %v513 = vunpack.c.l.b16 %v365
          %v514 = vunpack.c.l.b16 %v366
          %v515 = vunpack.c.l.b16 %v367
          %v516 = vpack.c.b16 %v485, %v484
          %v517 = vpack.c.b16 %v487, %v486
          %v518 = vpack.c.b16 %v489, %v488
          %v519 = vpack.c.b16 %v491, %v490
          %v520 = vpack.c.b16 %v493, %v492
          %v521 = vpack.c.b16 %v495, %v494
          %v522 = vpack.c.b16 %v497, %v496
          %v523 = vpack.c.b16 %v499, %v498
          %v524 = vpack.c.b16 %v501, %v500
          %v525 = vpack.c.b16 %v503, %v502
          %v526 = vpack.c.b16 %v505, %v504
          %v527 = vpack.c.b16 %v507, %v506
          %v528 = vpack.c.b16 %v509, %v508
          %v529 = vpack.c.b16 %v511, %v510
          %v530 = vpack.c.b16 %v513, %v512
          %v531 = vpack.c.b16 %v515, %v514
          %548 = vmatpush.bf16.msra.mxu0 %v523
          %549 = vmatpush.bf16.msra.mxu0 %v522
          %550 = vmatpush.bf16.msra.mxu0 %v521
          %551 = vmatpush.bf16.msra.mxu0 %v520
          %552 = vmatpush.bf16.msra.mxu0 %v519
          %553 = vmatpush.bf16.msra.mxu0 %v518
          %554 = vmatpush.bf16.msra.mxu0 %v517
          %555 = vmatpush.bf16.msra.mxu0 %v516
          %556 = vmatmul.bf16.gmra.mxu0 %v420
          %v557 = vpop.f32.mrf.mxu0
          %v558 = vadd.f32 %v370, %v557
          %v559 = vpop.f32.mrf.mxu0
          %v560 = vadd.f32 %v370, %v559
          %561 = vmatmul.bf16.gmra.mxu0 %v422
          %v562 = vpop.f32.mrf.mxu0
          %v563 = vadd.f32 %v370, %v562
          %v564 = vpop.f32.mrf.mxu0
          %v565 = vadd.f32 %v370, %v564
          %566 = vmatmul.bf16.gmra.mxu0 %v424
          %v567 = vpop.f32.mrf.mxu0
          %v568 = vadd.f32 %v370, %v567
          %v569 = vpop.f32.mrf.mxu0
          %v570 = vadd.f32 %v370, %v569
          %571 = vmatmul.bf16.gmra.mxu0 %v426
          %v572 = vpop.f32.mrf.mxu0
          %v573 = vadd.f32 %v370, %v572
          %v574 = vpop.f32.mrf.mxu0
          %v575 = vadd.f32 %v370, %v574
          %576 = vmatmul.bf16.gmra.mxu0 %v428
          %v577 = vpop.f32.mrf.mxu0
          %v578 = vadd.f32 %v370, %v577
          %v579 = vpop.f32.mrf.mxu0
          %v580 = vadd.f32 %v370, %v579
          %581 = vmatmul.bf16.gmra.mxu0 %v430
          %v582 = vpop.f32.mrf.mxu0
          %v583 = vadd.f32 %v370, %v582
          %v584 = vpop.f32.mrf.mxu0
          %v585 = vadd.f32 %v370, %v584
          %586 = vmatmul.bf16.gmra.mxu0 %v432
          %v587 = vpop.f32.mrf.mxu0
          %v588 = vadd.f32 %v370, %v587
          %v589 = vpop.f32.mrf.mxu0
          %v590 = vadd.f32 %v370, %v589
          %591 = vmatmul.bf16.gmra.mxu0 %v434
          %v592 = vpop.f32.mrf.mxu0
          %v593 = vadd.f32 %v370, %v592
          %v594 = vpop.f32.mrf.mxu0
          %v595 = vadd.f32 %v370, %v594
          %596 = vdwg.mxu0
          %597 = vmatpush.bf16.msra.mxu0 %v531
          %598 = vmatpush.bf16.msra.mxu0 %v530
          %599 = vmatpush.bf16.msra.mxu0 %v529
          %600 = vmatpush.bf16.msra.mxu0 %v528
          %601 = vmatpush.bf16.msra.mxu0 %v527
          %602 = vmatpush.bf16.msra.mxu0 %v526
          %603 = vmatpush.bf16.msra.mxu0 %v525
          %604 = vmatpush.bf16.msra.mxu0 %v524
          %605 = vmatmul.bf16.gmra.mxu0 %v421
          %v606 = vpop.f32.mrf.mxu0
          %v607 = vadd.f32 %v558, %v606
          %v608 = vpop.f32.mrf.mxu0
          %v609 = vadd.f32 %v560, %v608
          %610 = vmatmul.bf16.gmra.mxu0 %v423
          %v611 = vpop.f32.mrf.mxu0
          %v612 = vadd.f32 %v563, %v611
          %v613 = vpop.f32.mrf.mxu0
          %v614 = vadd.f32 %v565, %v613
          %615 = vmatmul.bf16.gmra.mxu0 %v425
          %v616 = vpop.f32.mrf.mxu0
          %v617 = vadd.f32 %v568, %v616
          %v618 = vpop.f32.mrf.mxu0
          %v619 = vadd.f32 %v570, %v618
          %620 = vmatmul.bf16.gmra.mxu0 %v427
          %v621 = vpop.f32.mrf.mxu0
          %v622 = vadd.f32 %v573, %v621
          %v623 = vpop.f32.mrf.mxu0
          %v624 = vadd.f32 %v575, %v623
          %625 = vmatmul.bf16.gmra.mxu0 %v429
          %v626 = vpop.f32.mrf.mxu0
          %v627 = vadd.f32 %v578, %v626
          %v628 = vpop.f32.mrf.mxu0
          %v629 = vadd.f32 %v580, %v628
          %630 = vmatmul.bf16.gmra.mxu0 %v431
          %v631 = vpop.f32.mrf.mxu0
          %v632 = vadd.f32 %v583, %v631
          %v633 = vpop.f32.mrf.mxu0
          %v634 = vadd.f32 %v585, %v633
          %635 = vmatmul.bf16.gmra.mxu0 %v433
          %v636 = vpop.f32.mrf.mxu0
          %v637 = vadd.f32 %v588, %v636
          %v638 = vpop.f32.mrf.mxu0
          %v639 = vadd.f32 %v590, %v638
          %640 = vmatmul.bf16.gmra.mxu0 %v435
          %v641 = vpop.f32.mrf.mxu0
          %v642 = vadd.f32 %v593, %v641
          %v643 = vpop.f32.mrf.mxu0
          %v644 = vadd.f32 %v595, %v643
          %645 = vdwg.mxu0
          %v646 = vmax.f32 %v607, 0.0
          %v647 = vmax.f32 %v609, 0.0
          %v648 = vmax.f32 %v612, 0.0
          %v649 = vmax.f32 %v614, 0.0
          %v650 = vmax.f32 %v617, 0.0
          %v651 = vmax.f32 %v619, 0.0
          %v652 = vmax.f32 %v622, 0.0
          %v653 = vmax.f32 %v624, 0.0
          %v654 = vmax.f32 %v627, 0.0
          %v655 = vmax.f32 %v629, 0.0
          %v656 = vmax.f32 %v632, 0.0
          %v657 = vmax.f32 %v634, 0.0
          %v658 = vmax.f32 %v637, 0.0
          %v659 = vmax.f32 %v639, 0.0
          %v660 = vmax.f32 %v642, 0.0
          %v661 = vmax.f32 %v644, 0.0
          %s662 = smul.addr %s311, 4
          %s663 = scalar_lea.vmem [#allocation9], %s662
          %v664 = vld [vmem:[%s663] sm:$0xf]
          %v665 = vld [vmem:[%s663 + $0x4] sm:$0xf]
          %v666 = vld [vmem:[%s663 + $0x8] sm:$0xf]
          %v667 = vld [vmem:[%s663 + $0xc] sm:$0xf]
          %v668 = vld [vmem:[%s663 + $0x10] sm:$0xf]
          %v669 = vld [vmem:[%s663 + $0x14] sm:$0xf]
          %v670 = vld [vmem:[%s663 + $0x18] sm:$0xf]
          %v671 = vld [vmem:[%s663 + $0x1c] sm:$0xf]
          %v672 = vld [vmem:[%s663 + $0x20] sm:$0xf]
          %v673 = vld [vmem:[%s663 + $0x24] sm:$0xf]
          %v674 = vld [vmem:[%s663 + $0x28] sm:$0xf]
          %v675 = vld [vmem:[%s663 + $0x2c] sm:$0xf]
          %v676 = vld [vmem:[%s663 + $0x30] sm:$0xf]
          %v677 = vld [vmem:[%s663 + $0x34] sm:$0xf]
          %v678 = vld [vmem:[%s663 + $0x38] sm:$0xf]
          %v679 = vld [vmem:[%s663 + $0x3c] sm:$0xf]
          %v680 = vunpack.c.l.bf16 %v664
          %v681 = vunpack.c.l.bf16 %v665
          %v682 = vunpack.c.l.bf16 %v666
          %v683 = vunpack.c.l.bf16 %v667
          %v684 = vunpack.c.l.bf16 %v668
          %v685 = vunpack.c.l.bf16 %v669
          %v686 = vunpack.c.l.bf16 %v670
          %v687 = vunpack.c.l.bf16 %v671
          %v688 = vunpack.c.l.bf16 %v672
          %v689 = vunpack.c.l.bf16 %v673
          %v690 = vunpack.c.l.bf16 %v674
          %v691 = vunpack.c.l.bf16 %v675
          %v692 = vunpack.c.l.bf16 %v676
          %v693 = vunpack.c.l.bf16 %v677
          %v694 = vunpack.c.l.bf16 %v678
          %v695 = vunpack.c.l.bf16 %v679
          %v696 = vmul.f32 %v646, %v680
          %v697 = vmul.f32 %v647, %v681
          %v698 = vmul.f32 %v648, %v682
          %v699 = vmul.f32 %v649, %v683
          %v700 = vmul.f32 %v650, %v684
          %v701 = vmul.f32 %v651, %v685
          %v702 = vmul.f32 %v652, %v686
          %v703 = vmul.f32 %v653, %v687
          %v704 = vmul.f32 %v654, %v688
          %v705 = vmul.f32 %v655, %v689
          %v706 = vmul.f32 %v656, %v690
          %v707 = vmul.f32 %v657, %v691
          %v708 = vmul.f32 %v658, %v692
          %v709 = vmul.f32 %v659, %v693
          %v710 = vmul.f32 %v660, %v694
          %v711 = vmul.f32 %v661, %v695
          %v712 = vpack.c.bf16 %v697, %v696
          %v713 = vpack.c.bf16 %v699, %v698
          %v714 = vpack.c.bf16 %v701, %v700
          %v715 = vpack.c.bf16 %v703, %v702
          %v716 = vpack.c.bf16 %v705, %v704
          %v717 = vpack.c.bf16 %v707, %v706
          %v718 = vpack.c.bf16 %v709, %v708
          %v719 = vpack.c.bf16 %v711, %v710
          %v720 = vld [vmem:[#allocation8] sm:$0xf]
          %v721 = vld [vmem:[#allocation8 + $0x4] sm:$0xf]
          %v722 = vld [vmem:[#allocation8 + $0x8] sm:$0xf]
          %v723 = vld [vmem:[#allocation8 + $0xc] sm:$0xf]
          %v724 = vld [vmem:[#allocation8 + $0x10] sm:$0xf]
          %v725 = vld [vmem:[#allocation8 + $0x14] sm:$0xf]
          %v726 = vld [vmem:[#allocation8 + $0x18] sm:$0xf]
          %v727 = vld [vmem:[#allocation8 + $0x1c] sm:$0xf]
          %v728 = vld [vmem:[#allocation8 + $0x20] sm:$0xf]
          %v729 = vld [vmem:[#allocation8 + $0x24] sm:$0xf]
          %v730 = vld [vmem:[#allocation8 + $0x28] sm:$0xf]
          %v731 = vld [vmem:[#allocation8 + $0x2c] sm:$0xf]
          %v732 = vld [vmem:[#allocation8 + $0x30] sm:$0xf]
          %v733 = vld [vmem:[#allocation8 + $0x34] sm:$0xf]
          %v734 = vld [vmem:[#allocation8 + $0x38] sm:$0xf]
          %v735 = vld [vmem:[#allocation8 + $0x3c] sm:$0xf]
          %v752 = vunpack.c.l.b16 %v720
          %v753 = vunpack.c.l.b16 %v721
          %v754 = vunpack.c.l.b16 %v722
          %v755 = vunpack.c.l.b16 %v723
          %v756 = vunpack.c.l.b16 %v724
          %v757 = vunpack.c.l.b16 %v725
          %v758 = vunpack.c.l.b16 %v726
          %v759 = vunpack.c.l.b16 %v727
          %v760 = vunpack.c.l.b16 %v728
          %v761 = vunpack.c.l.b16 %v729
          %v762 = vunpack.c.l.b16 %v730
          %v763 = vunpack.c.l.b16 %v731
          %v764 = vunpack.c.l.b16 %v732
          %v765 = vunpack.c.l.b16 %v733
          %v766 = vunpack.c.l.b16 %v734
          %v767 = vunpack.c.l.b16 %v735
          %v768 = vpack.c.b16 %v753, %v752
          %v769 = vpack.c.b16 %v755, %v754
          %v770 = vpack.c.b16 %v757, %v756
          %v771 = vpack.c.b16 %v759, %v758
          %v772 = vpack.c.b16 %v761, %v760
          %v773 = vpack.c.b16 %v763, %v762
          %v774 = vpack.c.b16 %v765, %v764
          %v775 = vpack.c.b16 %v767, %v766
          %784 = vmatpush.bf16.msra.mxu0 %v775
          %785 = vmatpush.bf16.msra.mxu0 %v774
          %786 = vmatpush.bf16.msra.mxu0 %v773
          %787 = vmatpush.bf16.msra.mxu0 %v772
          %788 = vmatpush.bf16.msra.mxu0 %v771
          %789 = vmatpush.bf16.msra.mxu0 %v770
          %790 = vmatpush.bf16.msra.mxu0 %v769
          %791 = vmatpush.bf16.msra.mxu0 %v768
          %792 = vmatmul.bf16.gmra.mxu0 %v712
          %v793 = vpop.f32.mrf.mxu0
          %v794 = vadd.f32 0.0, %v793
          %v795 = vpop.f32.mrf.mxu0
          %v796 = vadd.f32 0.0, %v795
          %797 = vmatmul.bf16.gmra.mxu0 %v713
          %v798 = vpop.f32.mrf.mxu0
          %v799 = vadd.f32 0.0, %v798
          %v800 = vpop.f32.mrf.mxu0
          %v801 = vadd.f32 0.0, %v800
          %802 = vmatmul.bf16.gmra.mxu0 %v714
          %v803 = vpop.f32.mrf.mxu0
          %v804 = vadd.f32 0.0, %v803
          %v805 = vpop.f32.mrf.mxu0
          %v806 = vadd.f32 0.0, %v805
          %807 = vmatmul.bf16.gmra.mxu0 %v715
          %v808 = vpop.f32.mrf.mxu0
          %v809 = vadd.f32 0.0, %v808
          %v810 = vpop.f32.mrf.mxu0
          %v811 = vadd.f32 0.0, %v810
          %812 = vmatmul.bf16.gmra.mxu0 %v716
          %v813 = vpop.f32.mrf.mxu0
          %v814 = vadd.f32 0.0, %v813
          %v815 = vpop.f32.mrf.mxu0
          %v816 = vadd.f32 0.0, %v815
          %817 = vmatmul.bf16.gmra.mxu0 %v717
          %v818 = vpop.f32.mrf.mxu0
          %v819 = vadd.f32 0.0, %v818
          %v820 = vpop.f32.mrf.mxu0
          %v821 = vadd.f32 0.0, %v820
          %822 = vmatmul.bf16.gmra.mxu0 %v718
          %v823 = vpop.f32.mrf.mxu0
          %v824 = vadd.f32 0.0, %v823
          %v825 = vpop.f32.mrf.mxu0
          %v826 = vadd.f32 0.0, %v825
          %827 = vmatmul.bf16.gmra.mxu0 %v719
          %v828 = vpop.f32.mrf.mxu0
          %v829 = vadd.f32 0.0, %v828
          %v830 = vpop.f32.mrf.mxu0
          %v831 = vadd.f32 0.0, %v830
          %832 = vdwg.mxu0
          %v833 = vpack.c.bf16 %v794, %v794
          %v834 = vpack.c.bf16 %v796, %v796
          %v835 = vpack.c.bf16 %v799, %v799
          %v836 = vpack.c.bf16 %v801, %v801
          %v837 = vpack.c.bf16 %v804, %v804
          %v838 = vpack.c.bf16 %v806, %v806
          %v839 = vpack.c.bf16 %v809, %v809
          %v840 = vpack.c.bf16 %v811, %v811
          %v841 = vpack.c.bf16 %v814, %v814
          %v842 = vpack.c.bf16 %v816, %v816
          %v843 = vpack.c.bf16 %v819, %v819
          %v844 = vpack.c.bf16 %v821, %v821
          %v845 = vpack.c.bf16 %v824, %v824
          %v846 = vpack.c.bf16 %v826, %v826
          %v847 = vpack.c.bf16 %v829, %v829
          %v848 = vpack.c.bf16 %v831, %v831
          %s849 = smul.addr %s311, 4
          %s850 = scalar_lea.vmem [#allocation2], %s849
          %851 = vst [vmem:[%s850] sm:$0xf] %v833
          %852 = vst [vmem:[%s850 + $0x4] sm:$0xf] %v834
          %853 = vst [vmem:[%s850 + $0x8] sm:$0xf] %v835
          %854 = vst [vmem:[%s850 + $0xc] sm:$0xf] %v836
          %855 = vst [vmem:[%s850 + $0x10] sm:$0xf] %v837
          %856 = vst [vmem:[%s850 + $0x14] sm:$0xf] %v838
          %857 = vst [vmem:[%s850 + $0x18] sm:$0xf] %v839
          %858 = vst [vmem:[%s850 + $0x1c] sm:$0xf] %v840
          %859 = vst [vmem:[%s850 + $0x20] sm:$0xf] %v841
          %860 = vst [vmem:[%s850 + $0x24] sm:$0xf] %v842
          %861 = vst [vmem:[%s850 + $0x28] sm:$0xf] %v843
          %862 = vst [vmem:[%s850 + $0x2c] sm:$0xf] %v844
          %863 = vst [vmem:[%s850 + $0x30] sm:$0xf] %v845
          %864 = vst [vmem:[%s850 + $0x34] sm:$0xf] %v846
          %865 = vst [vmem:[%s850 + $0x38] sm:$0xf] %v847
          %866 = vst [vmem:[%s850 + $0x3c] sm:$0xf] %v848
        $region64: #{tpu_custom_call.1} parent=43 // pred_fallthru
          _
        %p867 = scmp.eq.s32.totalorder %s27, 1
        // Predicated region
        $region65: #{tpu_custom_call.1} parent=43 // pred_check
          %p868 = pneg %p867
        $region66: #{tpu_custom_call.1} parent=43 // pred_check_branch
          %870 = sbr.rel (%p868) target = $region68
        $region67: #{tpu_custom_call.1} parent=43 // pred_region
          %v871 = vld [vmem:[#allocation2] sm:$0xf]
          %v872 = vld [vmem:[#allocation2 + $0x4] sm:$0xf]
          %v873 = vld [vmem:[#allocation2 + $0x8] sm:$0xf]
          %v874 = vld [vmem:[#allocation2 + $0xc] sm:$0xf]
          %v875 = vld [vmem:[#allocation2 + $0x10] sm:$0xf]
          %v876 = vld [vmem:[#allocation2 + $0x14] sm:$0xf]
          %v877 = vld [vmem:[#allocation2 + $0x18] sm:$0xf]
          %v878 = vld [vmem:[#allocation2 + $0x1c] sm:$0xf]
          %v879 = vld [vmem:[#allocation2 + $0x20] sm:$0xf]
          %v880 = vld [vmem:[#allocation2 + $0x24] sm:$0xf]
          %v881 = vld [vmem:[#allocation2 + $0x28] sm:$0xf]
          %v882 = vld [vmem:[#allocation2 + $0x2c] sm:$0xf]
          %v883 = vld [vmem:[#allocation2 + $0x30] sm:$0xf]
          %v884 = vld [vmem:[#allocation2 + $0x34] sm:$0xf]
          %v885 = vld [vmem:[#allocation2 + $0x38] sm:$0xf]
          %v886 = vld [vmem:[#allocation2 + $0x3c] sm:$0xf]
          %v887 = vld [vmem:[#allocation2 + $0x40] sm:$0xf]
          %v888 = vld [vmem:[#allocation2 + $0x44] sm:$0xf]
          %v889 = vld [vmem:[#allocation2 + $0x48] sm:$0xf]
          %v890 = vld [vmem:[#allocation2 + $0x4c] sm:$0xf]
          %v891 = vld [vmem:[#allocation2 + $0x50] sm:$0xf]
          %v892 = vld [vmem:[#allocation2 + $0x54] sm:$0xf]
          %v893 = vld [vmem:[#allocation2 + $0x58] sm:$0xf]
          %v894 = vld [vmem:[#allocation2 + $0x5c] sm:$0xf]
          %v895 = vld [vmem:[#allocation2 + $0x60] sm:$0xf]
          %v896 = vld [vmem:[#allocation2 + $0x64] sm:$0xf]
          %v897 = vld [vmem:[#allocation2 + $0x68] sm:$0xf]
          %v898 = vld [vmem:[#allocation2 + $0x6c] sm:$0xf]
          %v899 = vld [vmem:[#allocation2 + $0x70] sm:$0xf]
          %v900 = vld [vmem:[#allocation2 + $0x74] sm:$0xf]
          %v901 = vld [vmem:[#allocation2 + $0x78] sm:$0xf]
          %v902 = vld [vmem:[#allocation2 + $0x7c] sm:$0xf]
          %v903 = vld [vmem:[%s5] sm:$0x1]
          %v905 = vperm.slane %v903, 0
          %v923 = vunpack.c.l.b16 %v316
          %v924 = vunpack.c.h.b16 %v316
          %v925 = vunpack.c.l.b16 %v317
          %v926 = vunpack.c.h.b16 %v317
          %v927 = vunpack.c.l.b16 %v318
          %v928 = vunpack.c.h.b16 %v318
          %v929 = vunpack.c.l.b16 %v319
          %v930 = vunpack.c.h.b16 %v319
          %v931 = vunpack.c.l.b16 %v320
          %v932 = vunpack.c.h.b16 %v320
          %v933 = vunpack.c.l.b16 %v321
          %v934 = vunpack.c.h.b16 %v321
          %v935 = vunpack.c.l.b16 %v322
          %v936 = vunpack.c.h.b16 %v322
          %v937 = vunpack.c.l.b16 %v323
          %v938 = vunpack.c.h.b16 %v323
          %v939 = vunpack.c.l.b16 %v324
          %v940 = vunpack.c.h.b16 %v324
          %v941 = vunpack.c.l.b16 %v325
          %v942 = vunpack.c.h.b16 %v325
          %v943 = vunpack.c.l.b16 %v326
          %v944 = vunpack.c.h.b16 %v326
          %v945 = vunpack.c.l.b16 %v327
          %v946 = vunpack.c.h.b16 %v327
          %v947 = vunpack.c.l.b16 %v328
          %v948 = vunpack.c.h.b16 %v328
          %v949 = vunpack.c.l.b16 %v329
          %v950 = vunpack.c.h.b16 %v329
          %v951 = vunpack.c.l.b16 %v330
          %v952 = vunpack.c.h.b16 %v330
          %v953 = vunpack.c.l.b16 %v331
          %v954 = vunpack.c.h.b16 %v331
          %v955 = vpack.c.b16 %v925, %v923
          %v956 = vpack.c.b16 %v926, %v924
          %v957 = vpack.c.b16 %v929, %v927
          %v958 = vpack.c.b16 %v930, %v928
          %v959 = vpack.c.b16 %v933, %v931
          %v960 = vpack.c.b16 %v934, %v932
          %v961 = vpack.c.b16 %v937, %v935
          %v962 = vpack.c.b16 %v938, %v936
          %v963 = vpack.c.b16 %v941, %v939
          %v964 = vpack.c.b16 %v942, %v940
          %v965 = vpack.c.b16 %v945, %v943
          %v966 = vpack.c.b16 %v946, %v944
          %v967 = vpack.c.b16 %v949, %v947
          %v968 = vpack.c.b16 %v950, %v948
          %v969 = vpack.c.b16 %v953, %v951
          %v970 = vpack.c.b16 %v954, %v952
          %v1019 = vunpack.c.l.b16 %v871
          %v1020 = vunpack.c.l.b16 %v872
          %v1021 = vunpack.c.l.b16 %v873
          %v1022 = vunpack.c.l.b16 %v874
          %v1023 = vunpack.c.l.b16 %v875
          %v1024 = vunpack.c.l.b16 %v876
          %v1025 = vunpack.c.l.b16 %v877
          %v1026 = vunpack.c.l.b16 %v878
          %v1027 = vunpack.c.l.b16 %v879
          %v1028 = vunpack.c.l.b16 %v880
          %v1029 = vunpack.c.l.b16 %v881
          %v1030 = vunpack.c.l.b16 %v882
          %v1031 = vunpack.c.l.b16 %v883
          %v1032 = vunpack.c.l.b16 %v884
          %v1033 = vunpack.c.l.b16 %v885
          %v1034 = vunpack.c.l.b16 %v886
          %v1035 = vunpack.c.l.b16 %v887
          %v1036 = vunpack.c.l.b16 %v888
          %v1037 = vunpack.c.l.b16 %v889
          %v1038 = vunpack.c.l.b16 %v890
          %v1039 = vunpack.c.l.b16 %v891
          %v1040 = vunpack.c.l.b16 %v892
          %v1041 = vunpack.c.l.b16 %v893
          %v1042 = vunpack.c.l.b16 %v894
          %v1043 = vunpack.c.l.b16 %v895
          %v1044 = vunpack.c.l.b16 %v896
          %v1045 = vunpack.c.l.b16 %v897
          %v1046 = vunpack.c.l.b16 %v898
          %v1047 = vunpack.c.l.b16 %v899
          %v1048 = vunpack.c.l.b16 %v900
          %v1049 = vunpack.c.l.b16 %v901
          %v1050 = vunpack.c.l.b16 %v902
          %v1051 = vpack.c.b16 %v1020, %v1019
          %v1052 = vpack.c.b16 %v1022, %v1021
          %v1053 = vpack.c.b16 %v1024, %v1023
          %v1054 = vpack.c.b16 %v1026, %v1025
          %v1055 = vpack.c.b16 %v1028, %v1027
          %v1056 = vpack.c.b16 %v1030, %v1029
          %v1057 = vpack.c.b16 %v1032, %v1031
          %v1058 = vpack.c.b16 %v1034, %v1033
          %v1059 = vpack.c.b16 %v1036, %v1035
          %v1060 = vpack.c.b16 %v1038, %v1037
          %v1061 = vpack.c.b16 %v1040, %v1039
          %v1062 = vpack.c.b16 %v1042, %v1041
          %v1063 = vpack.c.b16 %v1044, %v1043
          %v1064 = vpack.c.b16 %v1046, %v1045
          %v1065 = vpack.c.b16 %v1048, %v1047
          %v1066 = vpack.c.b16 %v1050, %v1049
          %1083 = vmatpush.bf16.msra.mxu0 %v1058
          %1084 = vmatpush.bf16.msra.mxu0 %v1057
          %1085 = vmatpush.bf16.msra.mxu0 %v1056
          %1086 = vmatpush.bf16.msra.mxu0 %v1055
          %1087 = vmatpush.bf16.msra.mxu0 %v1054
          %1088 = vmatpush.bf16.msra.mxu0 %v1053
          %1089 = vmatpush.bf16.msra.mxu0 %v1052
          %1090 = vmatpush.bf16.msra.mxu0 %v1051
          %1091 = vmatmul.bf16.gmra.mxu0 %v955
          %v1092 = vpop.f32.mrf.mxu0
          %v1093 = vadd.f32 %v905, %v1092
          %v1094 = vpop.f32.mrf.mxu0
          %v1095 = vadd.f32 %v905, %v1094
          %1096 = vmatmul.bf16.gmra.mxu0 %v957
          %v1097 = vpop.f32.mrf.mxu0
          %v1098 = vadd.f32 %v905, %v1097
          %v1099 = vpop.f32.mrf.mxu0
          %v1100 = vadd.f32 %v905, %v1099
          %1101 = vmatmul.bf16.gmra.mxu0 %v959
          %v1102 = vpop.f32.mrf.mxu0
          %v1103 = vadd.f32 %v905, %v1102
          %v1104 = vpop.f32.mrf.mxu0
          %v1105 = vadd.f32 %v905, %v1104
          %1106 = vmatmul.bf16.gmra.mxu0 %v961
          %v1107 = vpop.f32.mrf.mxu0
          %v1108 = vadd.f32 %v905, %v1107
          %v1109 = vpop.f32.mrf.mxu0
          %v1110 = vadd.f32 %v905, %v1109
          %1111 = vmatmul.bf16.gmra.mxu0 %v963
          %v1112 = vpop.f32.mrf.mxu0
          %v1113 = vadd.f32 %v905, %v1112
          %v1114 = vpop.f32.mrf.mxu0
          %v1115 = vadd.f32 %v905, %v1114
          %1116 = vmatmul.bf16.gmra.mxu0 %v965
          %v1117 = vpop.f32.mrf.mxu0
          %v1118 = vadd.f32 %v905, %v1117
          %v1119 = vpop.f32.mrf.mxu0
          %v1120 = vadd.f32 %v905, %v1119
          %1121 = vmatmul.bf16.gmra.mxu0 %v967
          %v1122 = vpop.f32.mrf.mxu0
          %v1123 = vadd.f32 %v905, %v1122
          %v1124 = vpop.f32.mrf.mxu0
          %v1125 = vadd.f32 %v905, %v1124
          %1126 = vmatmul.bf16.gmra.mxu0 %v969
          %v1127 = vpop.f32.mrf.mxu0
          %v1128 = vadd.f32 %v905, %v1127
          %v1129 = vpop.f32.mrf.mxu0
          %v1130 = vadd.f32 %v905, %v1129
          %1131 = vdwg.mxu0
          %1132 = vmatpush.bf16.msra.mxu0 %v1066
          %1133 = vmatpush.bf16.msra.mxu0 %v1065
          %1134 = vmatpush.bf16.msra.mxu0 %v1064
          %1135 = vmatpush.bf16.msra.mxu0 %v1063
          %1136 = vmatpush.bf16.msra.mxu0 %v1062
          %1137 = vmatpush.bf16.msra.mxu0 %v1061
          %1138 = vmatpush.bf16.msra.mxu0 %v1060
          %1139 = vmatpush.bf16.msra.mxu0 %v1059
          %1140 = vmatmul.bf16.gmra.mxu0 %v956
          %v1141 = vpop.f32.mrf.mxu0
          %v1142 = vadd.f32 %v1093, %v1141
          %v1143 = vpop.f32.mrf.mxu0
          %v1144 = vadd.f32 %v1095, %v1143
          %1145 = vmatmul.bf16.gmra.mxu0 %v958
          %v1146 = vpop.f32.mrf.mxu0
          %v1147 = vadd.f32 %v1098, %v1146
          %v1148 = vpop.f32.mrf.mxu0
          %v1149 = vadd.f32 %v1100, %v1148
          %1150 = vmatmul.bf16.gmra.mxu0 %v960
          %v1151 = vpop.f32.mrf.mxu0
          %v1152 = vadd.f32 %v1103, %v1151
          %v1153 = vpop.f32.mrf.mxu0
          %v1154 = vadd.f32 %v1105, %v1153
          %1155 = vmatmul.bf16.gmra.mxu0 %v962
          %v1156 = vpop.f32.mrf.mxu0
          %v1157 = vadd.f32 %v1108, %v1156
          %v1158 = vpop.f32.mrf.mxu0
          %v1159 = vadd.f32 %v1110, %v1158
          %1160 = vmatmul.bf16.gmra.mxu0 %v964
          %v1161 = vpop.f32.mrf.mxu0
          %v1162 = vadd.f32 %v1113, %v1161
          %v1163 = vpop.f32.mrf.mxu0
          %v1164 = vadd.f32 %v1115, %v1163
          %1165 = vmatmul.bf16.gmra.mxu0 %v966
          %v1166 = vpop.f32.mrf.mxu0
          %v1167 = vadd.f32 %v1118, %v1166
          %v1168 = vpop.f32.mrf.mxu0
          %v1169 = vadd.f32 %v1120, %v1168
          %1170 = vmatmul.bf16.gmra.mxu0 %v968
          %v1171 = vpop.f32.mrf.mxu0
          %v1172 = vadd.f32 %v1123, %v1171
          %v1173 = vpop.f32.mrf.mxu0
          %v1174 = vadd.f32 %v1125, %v1173
          %1175 = vmatmul.bf16.gmra.mxu0 %v970
          %v1176 = vpop.f32.mrf.mxu0
          %v1177 = vadd.f32 %v1128, %v1176
          %v1178 = vpop.f32.mrf.mxu0
          %v1179 = vadd.f32 %v1130, %v1178
          %1180 = vdwg.mxu0
          %v1181 = vxor.u32 %v1142, 2147483648
          %v1182 = vxor.u32 %v1144, 2147483648
          %v1183 = vxor.u32 %v1147, 2147483648
          %v1184 = vxor.u32 %v1149, 2147483648
          %v1185 = vxor.u32 %v1152, 2147483648
          %v1186 = vxor.u32 %v1154, 2147483648
          %v1187 = vxor.u32 %v1157, 2147483648
          %v1188 = vxor.u32 %v1159, 2147483648
          %v1189 = vxor.u32 %v1162, 2147483648
          %v1190 = vxor.u32 %v1164, 2147483648
          %v1191 = vxor.u32 %v1167, 2147483648
          %v1192 = vxor.u32 %v1169, 2147483648
          %v1193 = vxor.u32 %v1172, 2147483648
          %v1194 = vxor.u32 %v1174, 2147483648
          %v1195 = vxor.u32 %v1177, 2147483648
          %v1196 = vxor.u32 %v1179, 2147483648
          %v1197 = vmul.f32 %v1181, 1.442695
          %v1198 = vpow.pop %v1197
          %v1199 = vmul.f32 %v1182, 1.442695
          %v1200 = vpow.pop %v1199
          %v1201 = vmul.f32 %v1183, 1.442695
          %v1202 = vpow.pop %v1201
          %v1203 = vmul.f32 %v1184, 1.442695
          %v1204 = vpow.pop %v1203
          %v1205 = vmul.f32 %v1185, 1.442695
          %v1206 = vpow.pop %v1205
          %v1207 = vmul.f32 %v1186, 1.442695
          %v1208 = vpow.pop %v1207
          %v1209 = vmul.f32 %v1187, 1.442695
          %v1210 = vpow.pop %v1209
          %v1211 = vmul.f32 %v1188, 1.442695
          %v1212 = vpow.pop %v1211
          %v1213 = vmul.f32 %v1189, 1.442695
          %v1214 = vpow.pop %v1213
          %v1215 = vmul.f32 %v1190, 1.442695
          %v1216 = vpow.pop %v1215
          %v1217 = vmul.f32 %v1191, 1.442695
          %v1218 = vpow.pop %v1217
          %v1219 = vmul.f32 %v1192, 1.442695
          %v1220 = vpow.pop %v1219
          %v1221 = vmul.f32 %v1193, 1.442695
          %v1222 = vpow.pop %v1221
          %v1223 = vmul.f32 %v1194, 1.442695
          %v1224 = vpow.pop %v1223
          %v1225 = vmul.f32 %v1195, 1.442695
          %v1226 = vpow.pop %v1225
          %v1227 = vmul.f32 %v1196, 1.442695
          %v1228 = vpow.pop %v1227
          %v1229 = vadd.f32 %v1198, 1.0
          %v1230 = vadd.f32 %v1200, 1.0
          %v1231 = vadd.f32 %v1202, 1.0
          %v1232 = vadd.f32 %v1204, 1.0
          %v1233 = vadd.f32 %v1206, 1.0
          %v1234 = vadd.f32 %v1208, 1.0
          %v1235 = vadd.f32 %v1210, 1.0
          %v1236 = vadd.f32 %v1212, 1.0
          %v1237 = vadd.f32 %v1214, 1.0
          %v1238 = vadd.f32 %v1216, 1.0
          %v1239 = vadd.f32 %v1218, 1.0
          %v1240 = vadd.f32 %v1220, 1.0
          %v1241 = vadd.f32 %v1222, 1.0
          %v1242 = vadd.f32 %v1224, 1.0
          %v1243 = vadd.f32 %v1226, 1.0
          %v1244 = vadd.f32 %v1228, 1.0
          %v1245 = vrcp.pop %v1229
          %v1246 = vmul.f32 %v1229, %v1245
          %v1247 = vsub.f32 1.0, %v1246
          %v1248 = vmul.f32 %v1245, %v1247
          %v1249 = vadd.f32 %v1245, %v1248
          %vm1250 = vweird.f32 %v1229
          %vm1251 = vweird.f32 %v1245
          %vm1252 = vmor %vm1250, %vm1251
          %v1253 = vsel %vm1252, %v1245, %v1249
          %v1254 = vand.u32 2147483647, %v1229
          %vm1255 = vcmp.eq.f32.partialorder %v1254, 8.507059e+37
          %v1256 = vand.u32 %v1229, 2147483648
          %v1257 = vor.u32 1.1754944e-38, %v1256
          %v1258 = vsel %vm1255, %v1257, %v1253
          %v1259 = vmul.f32 1.0, %v1258
          %v1260 = vrcp.pop %v1230
          %v1261 = vmul.f32 %v1230, %v1260
          %v1262 = vsub.f32 1.0, %v1261
          %v1263 = vmul.f32 %v1260, %v1262
          %v1264 = vadd.f32 %v1260, %v1263
          %vm1265 = vweird.f32 %v1230
          %vm1266 = vweird.f32 %v1260
          %vm1267 = vmor %vm1265, %vm1266
          %v1268 = vsel %vm1267, %v1260, %v1264
          %v1269 = vand.u32 2147483647, %v1230
          %vm1270 = vcmp.eq.f32.partialorder %v1269, 8.507059e+37
          %v1271 = vand.u32 %v1230, 2147483648
          %v1272 = vor.u32 1.1754944e-38, %v1271
          %v1273 = vsel %vm1270, %v1272, %v1268
          %v1274 = vmul.f32 1.0, %v1273
          %v1275 = vrcp.pop %v1231
          %v1276 = vmul.f32 %v1231, %v1275
          %v1277 = vsub.f32 1.0, %v1276
          %v1278 = vmul.f32 %v1275, %v1277
          %v1279 = vadd.f32 %v1275, %v1278
          %vm1280 = vweird.f32 %v1231
          %vm1281 = vweird.f32 %v1275
          %vm1282 = vmor %vm1280, %vm1281
          %v1283 = vsel %vm1282, %v1275, %v1279
          %v1284 = vand.u32 2147483647, %v1231
          %vm1285 = vcmp.eq.f32.partialorder %v1284, 8.507059e+37
          %v1286 = vand.u32 %v1231, 2147483648
          %v1287 = vor.u32 1.1754944e-38, %v1286
          %v1288 = vsel %vm1285, %v1287, %v1283
          %v1289 = vmul.f32 1.0, %v1288
          %v1290 = vrcp.pop %v1232
          %v1291 = vmul.f32 %v1232, %v1290
          %v1292 = vsub.f32 1.0, %v1291
          %v1293 = vmul.f32 %v1290, %v1292
          %v1294 = vadd.f32 %v1290, %v1293
          %vm1295 = vweird.f32 %v1232
          %vm1296 = vweird.f32 %v1290
          %vm1297 = vmor %vm1295, %vm1296
          %v1298 = vsel %vm1297, %v1290, %v1294
          %v1299 = vand.u32 2147483647, %v1232
          %vm1300 = vcmp.eq.f32.partialorder %v1299, 8.507059e+37
          %v1301 = vand.u32 %v1232, 2147483648
          %v1302 = vor.u32 1.1754944e-38, %v1301
          %v1303 = vsel %vm1300, %v1302, %v1298
          %v1304 = vmul.f32 1.0, %v1303
          %v1305 = vrcp.pop %v1233
          %v1306 = vmul.f32 %v1233, %v1305
          %v1307 = vsub.f32 1.0, %v1306
          %v1308 = vmul.f32 %v1305, %v1307
          %v1309 = vadd.f32 %v1305, %v1308
          %vm1310 = vweird.f32 %v1233
          %vm1311 = vweird.f32 %v1305
          %vm1312 = vmor %vm1310, %vm1311
          %v1313 = vsel %vm1312, %v1305, %v1309
          %v1314 = vand.u32 2147483647, %v1233
          %vm1315 = vcmp.eq.f32.partialorder %v1314, 8.507059e+37
          %v1316 = vand.u32 %v1233, 2147483648
          %v1317 = vor.u32 1.1754944e-38, %v1316
          %v1318 = vsel %vm1315, %v1317, %v1313
          %v1319 = vmul.f32 1.0, %v1318
          %v1320 = vrcp.pop %v1234
          %v1321 = vmul.f32 %v1234, %v1320
          %v1322 = vsub.f32 1.0, %v1321
          %v1323 = vmul.f32 %v1320, %v1322
          %v1324 = vadd.f32 %v1320, %v1323
          %vm1325 = vweird.f32 %v1234
          %vm1326 = vweird.f32 %v1320
          %vm1327 = vmor %vm1325, %vm1326
          %v1328 = vsel %vm1327, %v1320, %v1324
          %v1329 = vand.u32 2147483647, %v1234
          %vm1330 = vcmp.eq.f32.partialorder %v1329, 8.507059e+37
          %v1331 = vand.u32 %v1234, 2147483648
          %v1332 = vor.u32 1.1754944e-38, %v1331
          %v1333 = vsel %vm1330, %v1332, %v1328
          %v1334 = vmul.f32 1.0, %v1333
          %v1335 = vrcp.pop %v1235
          %v1336 = vmul.f32 %v1235, %v1335
          %v1337 = vsub.f32 1.0, %v1336
          %v1338 = vmul.f32 %v1335, %v1337
          %v1339 = vadd.f32 %v1335, %v1338
          %vm1340 = vweird.f32 %v1235
          %vm1341 = vweird.f32 %v1335
          %vm1342 = vmor %vm1340, %vm1341
          %v1343 = vsel %vm1342, %v1335, %v1339
          %v1344 = vand.u32 2147483647, %v1235
          %vm1345 = vcmp.eq.f32.partialorder %v1344, 8.507059e+37
          %v1346 = vand.u32 %v1235, 2147483648
          %v1347 = vor.u32 1.1754944e-38, %v1346
          %v1348 = vsel %vm1345, %v1347, %v1343
          %v1349 = vmul.f32 1.0, %v1348
          %v1350 = vrcp.pop %v1236
          %v1351 = vmul.f32 %v1236, %v1350
          %v1352 = vsub.f32 1.0, %v1351
          %v1353 = vmul.f32 %v1350, %v1352
          %v1354 = vadd.f32 %v1350, %v1353
          %vm1355 = vweird.f32 %v1236
          %vm1356 = vweird.f32 %v1350
          %vm1357 = vmor %vm1355, %vm1356
          %v1358 = vsel %vm1357, %v1350, %v1354
          %v1359 = vand.u32 2147483647, %v1236
          %vm1360 = vcmp.eq.f32.partialorder %v1359, 8.507059e+37
          %v1361 = vand.u32 %v1236, 2147483648
          %v1362 = vor.u32 1.1754944e-38, %v1361
          %v1363 = vsel %vm1360, %v1362, %v1358
          %v1364 = vmul.f32 1.0, %v1363
          %v1365 = vrcp.pop %v1237
          %v1366 = vmul.f32 %v1237, %v1365
          %v1367 = vsub.f32 1.0, %v1366
          %v1368 = vmul.f32 %v1365, %v1367
          %v1369 = vadd.f32 %v1365, %v1368
          %vm1370 = vweird.f32 %v1237
          %vm1371 = vweird.f32 %v1365
          %vm1372 = vmor %vm1370, %vm1371
          %v1373 = vsel %vm1372, %v1365, %v1369
          %v1374 = vand.u32 2147483647, %v1237
          %vm1375 = vcmp.eq.f32.partialorder %v1374, 8.507059e+37
          %v1376 = vand.u32 %v1237, 2147483648
          %v1377 = vor.u32 1.1754944e-38, %v1376
          %v1378 = vsel %vm1375, %v1377, %v1373
          %v1379 = vmul.f32 1.0, %v1378
          %v1380 = vrcp.pop %v1238
          %v1381 = vmul.f32 %v1238, %v1380
          %v1382 = vsub.f32 1.0, %v1381
          %v1383 = vmul.f32 %v1380, %v1382
          %v1384 = vadd.f32 %v1380, %v1383
          %vm1385 = vweird.f32 %v1238
          %vm1386 = vweird.f32 %v1380
          %vm1387 = vmor %vm1385, %vm1386
          %v1388 = vsel %vm1387, %v1380, %v1384
          %v1389 = vand.u32 2147483647, %v1238
          %vm1390 = vcmp.eq.f32.partialorder %v1389, 8.507059e+37
          %v1391 = vand.u32 %v1238, 2147483648
          %v1392 = vor.u32 1.1754944e-38, %v1391
          %v1393 = vsel %vm1390, %v1392, %v1388
          %v1394 = vmul.f32 1.0, %v1393
          %v1395 = vrcp.pop %v1239
          %v1396 = vmul.f32 %v1239, %v1395
          %v1397 = vsub.f32 1.0, %v1396
          %v1398 = vmul.f32 %v1395, %v1397
          %v1399 = vadd.f32 %v1395, %v1398
          %vm1400 = vweird.f32 %v1239
          %vm1401 = vweird.f32 %v1395
          %vm1402 = vmor %vm1400, %vm1401
          %v1403 = vsel %vm1402, %v1395, %v1399
          %v1404 = vand.u32 2147483647, %v1239
          %vm1405 = vcmp.eq.f32.partialorder %v1404, 8.507059e+37
          %v1406 = vand.u32 %v1239, 2147483648
          %v1407 = vor.u32 1.1754944e-38, %v1406
          %v1408 = vsel %vm1405, %v1407, %v1403
          %v1409 = vmul.f32 1.0, %v1408
          %v1410 = vrcp.pop %v1240
          %v1411 = vmul.f32 %v1240, %v1410
          %v1412 = vsub.f32 1.0, %v1411
          %v1413 = vmul.f32 %v1410, %v1412
          %v1414 = vadd.f32 %v1410, %v1413
          %vm1415 = vweird.f32 %v1240
          %vm1416 = vweird.f32 %v1410
          %vm1417 = vmor %vm1415, %vm1416
          %v1418 = vsel %vm1417, %v1410, %v1414
          %v1419 = vand.u32 2147483647, %v1240
          %vm1420 = vcmp.eq.f32.partialorder %v1419, 8.507059e+37
          %v1421 = vand.u32 %v1240, 2147483648
          %v1422 = vor.u32 1.1754944e-38, %v1421
          %v1423 = vsel %vm1420, %v1422, %v1418
          %v1424 = vmul.f32 1.0, %v1423
          %v1425 = vrcp.pop %v1241
          %v1426 = vmul.f32 %v1241, %v1425
          %v1427 = vsub.f32 1.0, %v1426
          %v1428 = vmul.f32 %v1425, %v1427
          %v1429 = vadd.f32 %v1425, %v1428
          %vm1430 = vweird.f32 %v1241
          %vm1431 = vweird.f32 %v1425
          %vm1432 = vmor %vm1430, %vm1431
          %v1433 = vsel %vm1432, %v1425, %v1429
          %v1434 = vand.u32 2147483647, %v1241
          %vm1435 = vcmp.eq.f32.partialorder %v1434, 8.507059e+37
          %v1436 = vand.u32 %v1241, 2147483648
          %v1437 = vor.u32 1.1754944e-38, %v1436
          %v1438 = vsel %vm1435, %v1437, %v1433
          %v1439 = vmul.f32 1.0, %v1438
          %v1440 = vrcp.pop %v1242
          %v1441 = vmul.f32 %v1242, %v1440
          %v1442 = vsub.f32 1.0, %v1441
          %v1443 = vmul.f32 %v1440, %v1442
          %v1444 = vadd.f32 %v1440, %v1443
          %vm1445 = vweird.f32 %v1242
          %vm1446 = vweird.f32 %v1440
          %vm1447 = vmor %vm1445, %vm1446
          %v1448 = vsel %vm1447, %v1440, %v1444
          %v1449 = vand.u32 2147483647, %v1242
          %vm1450 = vcmp.eq.f32.partialorder %v1449, 8.507059e+37
          %v1451 = vand.u32 %v1242, 2147483648
          %v1452 = vor.u32 1.1754944e-38, %v1451
          %v1453 = vsel %vm1450, %v1452, %v1448
          %v1454 = vmul.f32 1.0, %v1453
          %v1455 = vrcp.pop %v1243
          %v1456 = vmul.f32 %v1243, %v1455
          %v1457 = vsub.f32 1.0, %v1456
          %v1458 = vmul.f32 %v1455, %v1457
          %v1459 = vadd.f32 %v1455, %v1458
          %vm1460 = vweird.f32 %v1243
          %vm1461 = vweird.f32 %v1455
          %vm1462 = vmor %vm1460, %vm1461
          %v1463 = vsel %vm1462, %v1455, %v1459
          %v1464 = vand.u32 2147483647, %v1243
          %vm1465 = vcmp.eq.f32.partialorder %v1464, 8.507059e+37
          %v1466 = vand.u32 %v1243, 2147483648
          %v1467 = vor.u32 1.1754944e-38, %v1466
          %v1468 = vsel %vm1465, %v1467, %v1463
          %v1469 = vmul.f32 1.0, %v1468
          %v1470 = vrcp.pop %v1244
          %v1471 = vmul.f32 %v1244, %v1470
          %v1472 = vsub.f32 1.0, %v1471
          %v1473 = vmul.f32 %v1470, %v1472
          %v1474 = vadd.f32 %v1470, %v1473
          %vm1475 = vweird.f32 %v1244
          %vm1476 = vweird.f32 %v1470
          %vm1477 = vmor %vm1475, %vm1476
          %v1478 = vsel %vm1477, %v1470, %v1474
          %v1479 = vand.u32 2147483647, %v1244
          %vm1480 = vcmp.eq.f32.partialorder %v1479, 8.507059e+37
          %v1481 = vand.u32 %v1244, 2147483648
          %v1482 = vor.u32 1.1754944e-38, %v1481
          %v1483 = vsel %vm1480, %v1482, %v1478
          %v1484 = vmul.f32 1.0, %v1483
          %1485 = vst [vmem:[%s308] sm:$0xff] %v1259
          %1486 = vst [vmem:[%s308 + $0x8] sm:$0xff] %v1274
          %1487 = vst [vmem:[%s308 + $0x10] sm:$0xff] %v1289
          %1488 = vst [vmem:[%s308 + $0x18] sm:$0xff] %v1304
          %1489 = vst [vmem:[%s308 + $0x20] sm:$0xff] %v1319
          %1490 = vst [vmem:[%s308 + $0x28] sm:$0xff] %v1334
          %1491 = vst [vmem:[%s308 + $0x30] sm:$0xff] %v1349
          %1492 = vst [vmem:[%s308 + $0x38] sm:$0xff] %v1364
          %1493 = vst [vmem:[%s308 + $0x40] sm:$0xff] %v1379
          %1494 = vst [vmem:[%s308 + $0x48] sm:$0xff] %v1394
          %1495 = vst [vmem:[%s308 + $0x50] sm:$0xff] %v1409
          %1496 = vst [vmem:[%s308 + $0x58] sm:$0xff] %v1424
          %1497 = vst [vmem:[%s308 + $0x60] sm:$0xff] %v1439
          %1498 = vst [vmem:[%s308 + $0x68] sm:$0xff] %v1454
          %1499 = vst [vmem:[%s308 + $0x70] sm:$0xff] %v1469
          %1500 = vst [vmem:[%s308 + $0x78] sm:$0xff] %v1484
        $region68: #{tpu_custom_call.1} parent=43 // pred_fallthru
          _
        %s1501 = sand.u32 %s169, 1
        %s1502 = scalar_lea.sflag [#allocation5], %s1501
        %s1503 = sand.u32 %s169, 1
        %s1504 = smul.addr %s1503, 128
        %s1505 = scalar_lea.vmem [#allocation11], %s1504
        // Predicated region
        $region69: #{tpu_custom_call.1} parent=43 // pred_check
          %p1506 = pneg %p179
        $region70: #{tpu_custom_call.1} parent=43 // pred_check_branch
          %1508 = sbr.rel (%p1506) target = $region72
        $region71: #{tpu_custom_call.1} parent=43 // pred_region
          %s1509 = smul.u32 16, %s28
          %1511 = vsyncadd %s1502, 0
          %s1512 = smul.addr %s1509, 8
          %s1513 = scalar_lea.hbm %s6, %s1512
          %s1514 = sshll.u32 %s1505, 4
          %s1515 = int_to_ptr.vmem [resolvable:$true] %s1514
          %s1516 = sshll.u32 %s1513, 4
          %s1517 = int_to_ptr.hbm [resolvable:$true] %s1516
          %1522 = dma.vmem_to_hbm [thread:$0]  %s1515, 2048, %s1517, %s1502, 128, 128, 8
        $region72: #{tpu_custom_call.1} parent=43 // pred_fallthru
          _
      $region44: #{tpu_custom_call.1} parent=5 // pred_fallthru
        _
      %p1523 = scmp.le.s32.totalorder 2, %s18
      // Predicated region
      $region73: #{tpu_custom_call.1} parent=5 // pred_check
        %p1524 = pneg %p1523
      $region74: #{tpu_custom_call.1} parent=5 // pred_check_branch
        %1526 = sbr.rel (%p1524) target = $region76
      $region75: #{tpu_custom_call.1} parent=5 // pred_region
        %s1527 = ssub.s32 %s18, 2
        // Predicated region
        $region77: #{tpu_custom_call.1} parent=75 // pred_check
          %p1528 = pneg %p185
        $region78: #{tpu_custom_call.1} parent=75 // pred_check_branch
          %1530 = sbr.rel (%p1528) target = $region80
        $region79: #{tpu_custom_call.1} parent=75 // pred_region
          %s1531 = sand.u32 %s170, 1
          %s1532 = scalar_lea.sflag [#allocation5], %s1531
          %s1533 = sand.u32 %s170, 1
          %s1534 = smul.addr %s1533, 128
          %s1535 = scalar_lea.vmem [#allocation11], %s1534
          %1537 = dma.done %s1532, 2048
        $region80: #{tpu_custom_call.1} parent=75 // pred_fallthru
          _
      $region76: #{tpu_custom_call.1} parent=5 // pred_fallthru
        _
    $region6: #{tpu_custom_call.1} parent=1 // loop_footer
      %s22 = sadd.s32 1, %s18
    $region7: #{tpu_custom_call.1} parent=1 // loop_footer_branch
      %17 = sbr.rel target = $region3
    $region8: #{tpu_custom_call.1} parent=1 // loop_exit
      _
    %1538 = vsyncpa [#allocation4], 1
    %s1539 = scalar_lea.sflag [#allocation4], 1
    %1540 = vsyncpa %s1539, 1
    %1541 = vsyncpa [#allocation7], 1
    %1542 = vsyncpa [#allocation10], 1
    %1543 = vsyncpa [#allocation5], 1
    %s1544 = scalar_lea.sflag [#allocation5], 1
    %1545 = vsyncpa %s1544, 1

</llo_original>
